<compile_context>
chip_gen: v7x
topology: tpu7x:2x2x1
jax: 0.10.0
libtpu: 0.0.40
codegen_flags: <defaults>
</compile_context>

<pallas_src>
import jax
import jax.numpy as jnp
from jax.experimental import pallas as pl
from jax.experimental.pallas import tpu as pltpu

HIDDEN = 768
H1, H2, H3 = 64, 8, 1
OUT_LANES = 128      # logits emitted into a 128-lane slab; column 0 is the real logit


def _round_up(x, m):
    return ((x + m - 1) // m) * m


def _head_kernel(x_ref, wp_ref, bp_ref, w1_ref, b1_ref,
                 w2_ref, b2_ref, w3_ref, b3_ref, out_ref):
    # x_ref: [tile_b, 768] f32 CLS hidden states (DMA'd directly out of the
    #        flattened [B, S*768] last_hidden_state; columns 0..767 of each row
    #        are exactly token 0).
    cls = x_ref[...].astype(jnp.bfloat16)

    # BERT pooler: tanh(cls @ W_pool + b_pool); bf16 x bf16 on the MXU, f32 accum,
    # tanh kept in f32 (EUP) for accuracy / v5e friendliness.
    pooled = jnp.tanh(
        jnp.dot(cls, wp_ref[...], preferred_element_type=jnp.float32) + bp_ref[...]
    )

    # Dropout(p=0.1): identity in eval mode (inference semantics).

    # classifier: Linear(768,64) -> ReLU -> Linear(64,8) -> ReLU -> Linear(8,1)
    x1 = jnp.maximum(
        jnp.dot(pooled.astype(jnp.bfloat16), w1_ref[...],
                preferred_element_type=jnp.float32) + b1_ref[...],
        0.0,
    )
    x2 = jnp.maximum(
        jnp.dot(x1, w2_ref[...], preferred_element_type=jnp.float32) + b2_ref[...],
        0.0,
    )
    # Final layer is widened to 128 lanes (zero-padded cols) -> lane-dense store.
    logits = jnp.dot(x2, w3_ref[...], preferred_element_type=jnp.float32) + b3_ref[...]
    out_ref[...] = logits.astype(out_ref.dtype)


def custom_bert_head(last_hidden_state, params, *, tile_b=None):
    """last_hidden_state: [B, S, 768] float32. Returns logits [B, 1] float32."""
    B, S, H = last_hidden_state.shape
    assert H == HIDDEN

    if tile_b is None:
        # Fill the MXU M dimension (256 on v6e/v7x; 128+ already full on v5e)
        # without overshooting small batches.
        tile_b = min(256, _round_up(B, 8))
    tile_b = max(8, min(tile_b, _round_up(B, 8)))

    num_tiles = pl.cdiv(B, tile_b)
    b_pad = num_tiles * tile_b

    wp, bp, w1, b1, w2, b2, w3, b3 = params
    # bf16 weights for the two non-trivial matmuls; f32 accumulation in-kernel.
    wp = wp.astype(jnp.bfloat16)
    w1 = w1.astype(jnp.bfloat16)
    # biases broadcast along batch: keep them as [1, N] 2-D tiles (f32)
    bp = bp.reshape(1, HIDDEN).astype(jnp.float32)
    b1 = b1.reshape(1, H1).astype(jnp.float32)
    b2 = b2.reshape(1, H2).astype(jnp.float32)
    # widen the last Linear(8,1) to 128 output lanes (zeros beyond col 0)
    w3p = jnp.zeros((H2, OUT_LANES), jnp.float32).at[:, :H3].set(w3.astype(jnp.float32))
    b3p = jnp.zeros((1, OUT_LANES), jnp.float32).at[:, :H3].set(
        b3.reshape(1, H3).astype(jnp.float32))

    if B % tile_b == 0:
        # Fold the CLS slice into the BlockSpec: view hidden states as [B, S*H];
        # a (tile_b, HIDDEN) block at column-block 0 reads only token 0 of each row.
        x = last_hidden_state.reshape(B, S * HIDDEN)
    else:
        # Ragged batch: slice the (small) CLS slab and zero-pad to b_pad rows.
        cls = last_hidden_state[:, 0, :]
        x = jnp.pad(cls, ((0, b_pad - B), (0, 0)))

    full = lambda shape: pl.BlockSpec(shape, lambda i: (0, 0))  # grid-invariant block

    out = pl.pallas_call(
        _head_kernel,
        out_shape=jax.ShapeDtypeStruct((b_pad, OUT_LANES), jnp.float32),
        grid_spec=pltpu.PrefetchScalarGridSpec(
            num_scalar_prefetch=0,
            grid=(num_tiles,),
            in_specs=[
                pl.BlockSpec((tile_b, HIDDEN), lambda i: (i, 0)),   # CLS rows
                full((HIDDEN, HIDDEN)),      # W_pool (bf16)
                full((1, HIDDEN)),           # b_pool
                full((HIDDEN, H1)),          # W1 (bf16)
                full((1, H1)),               # b1
                full((H1, H2)),              # W2
                full((1, H2)),               # b2
                full((H2, OUT_LANES)),       # W3 (lane-widened)
                full((1, OUT_LANES)),        # b3 (lane-widened)
            ],
            out_specs=pl.BlockSpec((tile_b, OUT_LANES), lambda i: (i, 0)),
        ),
        compiler_params=pltpu.CompilerParams(
            dimension_semantics=("parallel",)),
    )(x, wp, bp, w1, b1, w2, b2, w3p, b3p)

    # Trim batch padding and keep only the real logit column.
    return out[:B, :H3]


def init_params(key):
    """Deterministic parameter init. Linear weights stored as [in, out]."""
    ks = jax.random.split(key, 8)
    scale = lambda fan_in: 1.0 / jnp.sqrt(jnp.float32(fan_in))
    wp = jax.random.normal(ks[0], (HIDDEN, HIDDEN), jnp.float32) * scale(HIDDEN)
    bp = jax.random.normal(ks[1], (HIDDEN,), jnp.float32) * 0.01
    w1 = jax.random.normal(ks[2], (HIDDEN, H1), jnp.float32) * scale(HIDDEN)
    b1 = jax.random.normal(ks[3], (H1,), jnp.float32) * 0.01
    w2 = jax.random.normal(ks[4], (H1, H2), jnp.float32) * scale(H1)
    b2 = jax.random.normal(ks[5], (H2,), jnp.float32) * 0.01
    w3 = jax.random.normal(ks[6], (H2, H3), jnp.float32) * scale(H2)
    b3 = jax.random.normal(ks[7], (H3,), jnp.float32) * 0.01
    return (wp, bp, w1, b1, w2, b2, w3, b3)


def reference_f32(last_hidden_state, params):
    """Pure-JAX f32 reference (module semantics)."""
    wp, bp, w1, b1, w2, b2, w3, b3 = params
    cls = last_hidden_state[:, 0, :]
    pooled = jnp.tanh(cls @ wp + bp)
    x1 = jnp.maximum(pooled @ w1 + b1, 0.0)
    x2 = jnp.maximum(x1 @ w2 + b2, 0.0)
    return x2 @ w3 + b3


def reference_matched(last_hidden_state, params):
    """Pure-JAX reference using the same bf16 weight casts / f32 accumulation."""
    wp, bp, w1, b1, w2, b2, w3, b3 = params
    cls = last_hidden_state[:, 0, :].astype(jnp.bfloat16)
    pooled = jnp.tanh(
        jnp.dot(cls, wp.astype(jnp.bfloat16), preferred_element_type=jnp.float32) + bp)
    x1 = jnp.maximum(
        jnp.dot(pooled.astype(jnp.bfloat16), w1.astype(jnp.bfloat16),
                preferred_element_type=jnp.float32) + b1, 0.0)
    x2 = jnp.maximum(x1 @ w2 + b2, 0.0)
    return x2 @ w3 + b3


if __name__ == "__main__":
    key = jax.random.PRNGKey(0)
    k_h, k_p = jax.random.split(key)

    B, S = 16, 8  # small batch / seq; hidden fixed at 768 by the module
    last_hidden_state = jax.random.normal(k_h, (B, S, HIDDEN), jnp.float32)
    params = init_params(k_p)

    logits = custom_bert_head(last_hidden_state, params)
    logits = jax.block_until_ready(logits)
    assert logits.shape == (B, 1)

    ref_m = reference_matched(last_hidden_state, params)
    ref_f = reference_f32(last_hidden_state, params)
    err_m = jnp.max(jnp.abs(logits - ref_m))
    err_f = jnp.max(jnp.abs(logits - ref_f))
    assert jnp.allclose(logits, ref_m, atol=2e-3, rtol=2e-3), f"matched err {err_m}"
    assert jnp.allclose(logits, ref_f, atol=5e-2, rtol=5e-2), f"f32 err {err_f}"

    print("KERNEL_OK")
</pallas_src>

<mosaic_0001>
module attributes {stable_mosaic.version = 11 : i64} {
  func.func @_head_kernel(%arg0: i32, %arg1: memref<16x768xf32, #tpu.memory_space<vmem>>, %arg2: memref<768x768xbf16, #tpu.memory_space<vmem>>, %arg3: memref<1x768xf32, #tpu.memory_space<vmem>>, %arg4: memref<768x64xbf16, #tpu.memory_space<vmem>>, %arg5: memref<1x64xf32, #tpu.memory_space<vmem>>, %arg6: memref<64x8xf32, #tpu.memory_space<vmem>>, %arg7: memref<1x8xf32, #tpu.memory_space<vmem>>, %arg8: memref<8x128xf32, #tpu.memory_space<vmem>>, %arg9: memref<1x128xf32, #tpu.memory_space<vmem>>, %arg10: memref<16x128xf32, #tpu.memory_space<vmem>>) attributes {dimension_semantics = [#tpu.dimension_semantics<parallel>], iteration_bounds = array<i64: 1>, scalar_prefetch = 0 : i64, scratch_operands = 0 : i64, tpu.core_type = #tpu.core_type<tc>, window_params = [{transform_indices = @transform_0, window_bounds = array<i64: 16, 768>}, {pipeline_mode = #tpu.pipeline_mode<synchronous>, transform_indices = @transform_1, window_bounds = array<i64: 768, 768>}, {pipeline_mode = #tpu.pipeline_mode<synchronous>, transform_indices = @transform_2, window_bounds = array<i64: 1, 768>}, {pipeline_mode = #tpu.pipeline_mode<synchronous>, transform_indices = @transform_3, window_bounds = array<i64: 768, 64>}, {pipeline_mode = #tpu.pipeline_mode<synchronous>, transform_indices = @transform_4, window_bounds = array<i64: 1, 64>}, {pipeline_mode = #tpu.pipeline_mode<synchronous>, transform_indices = @transform_5, window_bounds = array<i64: 64, 8>}, {pipeline_mode = #tpu.pipeline_mode<synchronous>, transform_indices = @transform_6, window_bounds = array<i64: 1, 8>}, {pipeline_mode = #tpu.pipeline_mode<synchronous>, transform_indices = @transform_7, window_bounds = array<i64: 8, 128>}, {pipeline_mode = #tpu.pipeline_mode<synchronous>, transform_indices = @transform_8, window_bounds = array<i64: 1, 128>}, {transform_indices = @transform_9, window_bounds = array<i64: 16, 128>}]} {
    %c0 = arith.constant 0 : index
    %c0_0 = arith.constant 0 : index
    %0 = vector.load %arg1[%c0, %c0_0] : memref<16x768xf32, #tpu.memory_space<vmem>>, vector<16x768xf32>
    %1 = arith.truncf %0 : vector<16x768xf32> to vector<16x768xbf16>
    %c0_1 = arith.constant 0 : index
    %c0_2 = arith.constant 0 : index
    %2 = vector.load %arg2[%c0_1, %c0_2] : memref<768x768xbf16, #tpu.memory_space<vmem>>, vector<768x768xbf16>
    %cst = arith.constant dense<0.000000e+00> : vector<16x768xf32>
    %3 = tpu.matmul %1, %2, %cst {dimension_numbers = #tpu.dot_dimension_numbers<[1], [0], [0], [1], [0, 0, 1, 1], [], []>} : vector<16x768xbf16>, vector<768x768xbf16>, vector<16x768xf32> -> vector<16x768xf32>
    %c0_3 = arith.constant 0 : index
    %c0_4 = arith.constant 0 : index
    %4 = vector.load %arg3[%c0_3, %c0_4] : memref<1x768xf32, #tpu.memory_space<vmem>>, vector<1x768xf32>
    %5 = vector.broadcast %4 : vector<1x768xf32> to vector<16x768xf32>
    %6 = arith.addf %3, %5 : vector<16x768xf32>
    %7 = math.tanh %6 : vector<16x768xf32>
    %8 = arith.truncf %7 : vector<16x768xf32> to vector<16x768xbf16>
    %c0_5 = arith.constant 0 : index
    %c0_6 = arith.constant 0 : index
    %9 = vector.load %arg4[%c0_5, %c0_6] : memref<768x64xbf16, #tpu.memory_space<vmem>>, vector<768x64xbf16>
    %cst_7 = arith.constant dense<0.000000e+00> : vector<16x64xf32>
    %10 = tpu.matmul %8, %9, %cst_7 {dimension_numbers = #tpu.dot_dimension_numbers<[1], [0], [0], [1], [0, 0, 1, 1], [], []>} : vector<16x768xbf16>, vector<768x64xbf16>, vector<16x64xf32> -> vector<16x64xf32>
    %c0_8 = arith.constant 0 : index
    %c0_9 = arith.constant 0 : index
    %11 = vector.load %arg5[%c0_8, %c0_9] : memref<1x64xf32, #tpu.memory_space<vmem>>, vector<1x64xf32>
    %12 = vector.broadcast %11 : vector<1x64xf32> to vector<16x64xf32>
    %13 = arith.addf %10, %12 : vector<16x64xf32>
    %cst_10 = arith.constant 0.000000e+00 : f32
    %14 = vector.broadcast %cst_10 : f32 to vector<16x64xf32>
    %15 = arith.maximumf %13, %14 : vector<16x64xf32>
    %c0_11 = arith.constant 0 : index
    %c0_12 = arith.constant 0 : index
    %16 = vector.load %arg6[%c0_11, %c0_12] : memref<64x8xf32, #tpu.memory_space<vmem>>, vector<64x8xf32>
    %cst_13 = arith.constant dense<0.000000e+00> : vector<16x8xf32>
    %17 = tpu.matmul %15, %16, %cst_13 {dimension_numbers = #tpu.dot_dimension_numbers<[1], [0], [0], [1], [0, 0, 1, 1], [], []>} : vector<16x64xf32>, vector<64x8xf32>, vector<16x8xf32> -> vector<16x8xf32>
    %c0_14 = arith.constant 0 : index
    %c0_15 = arith.constant 0 : index
    %18 = vector.load %arg7[%c0_14, %c0_15] : memref<1x8xf32, #tpu.memory_space<vmem>>, vector<1x8xf32>
    %19 = vector.broadcast %18 : vector<1x8xf32> to vector<16x8xf32>
    %20 = arith.addf %17, %19 : vector<16x8xf32>
    %cst_16 = arith.constant 0.000000e+00 : f32
    %21 = vector.broadcast %cst_16 : f32 to vector<16x8xf32>
    %22 = arith.maximumf %20, %21 : vector<16x8xf32>
    %c0_17 = arith.constant 0 : index
    %c0_18 = arith.constant 0 : index
    %23 = vector.load %arg8[%c0_17, %c0_18] : memref<8x128xf32, #tpu.memory_space<vmem>>, vector<8x128xf32>
    %cst_19 = arith.constant dense<0.000000e+00> : vector<16x128xf32>
    %24 = tpu.matmul %22, %23, %cst_19 {dimension_numbers = #tpu.dot_dimension_numbers<[1], [0], [0], [1], [0, 0, 1, 1], [], []>} : vector<16x8xf32>, vector<8x128xf32>, vector<16x128xf32> -> vector<16x128xf32>
    %c0_20 = arith.constant 0 : index
    %c0_21 = arith.constant 0 : index
    %25 = vector.load %arg9[%c0_20, %c0_21] : memref<1x128xf32, #tpu.memory_space<vmem>>, vector<1x128xf32>
    %26 = vector.broadcast %25 : vector<1x128xf32> to vector<16x128xf32>
    %27 = arith.addf %24, %26 : vector<16x128xf32>
    %c0_22 = arith.constant 0 : index
    %c0_23 = arith.constant 0 : index
    %28 = vector.load %arg10[%c0_22, %c0_23] : memref<16x128xf32, #tpu.memory_space<vmem>>, vector<16x128xf32>
    tpu.vector_store %arg10[%c0_22, %c0_23], %27 {strides = array<i32>} : memref<16x128xf32, #tpu.memory_space<vmem>>, vector<16x128xf32>,
    return
  }
  func.func @transform_0(%arg0: i32) -> (i32, i32) {
    %c0_i32 = arith.constant 0 : i32
    %c0_i32_0 = arith.constant 0 : i32
    return %arg0, %c0_i32 : i32, i32
  }
  func.func @transform_1(%arg0: i32) -> (i32, i32) {
    %c0_i32 = arith.constant 0 : i32
    %c0_i32_0 = arith.constant 0 : i32
    %c0_i32_1 = arith.constant 0 : i32
    return %c0_i32, %c0_i32_0 : i32, i32
  }
  func.func @transform_2(%arg0: i32) -> (i32, i32) {
    %c0_i32 = arith.constant 0 : i32
    %c0_i32_0 = arith.constant 0 : i32
    %c0_i32_1 = arith.constant 0 : i32
    return %c0_i32, %c0_i32_0 : i32, i32
  }
  func.func @transform_3(%arg0: i32) -> (i32, i32) {
    %c0_i32 = arith.constant 0 : i32
    %c0_i32_0 = arith.constant 0 : i32
    %c0_i32_1 = arith.constant 0 : i32
    return %c0_i32, %c0_i32_0 : i32, i32
  }
  func.func @transform_4(%arg0: i32) -> (i32, i32) {
    %c0_i32 = arith.constant 0 : i32
    %c0_i32_0 = arith.constant 0 : i32
    %c0_i32_1 = arith.constant 0 : i32
    return %c0_i32, %c0_i32_0 : i32, i32
  }
  func.func @transform_5(%arg0: i32) -> (i32, i32) {
    %c0_i32 = arith.constant 0 : i32
    %c0_i32_0 = arith.constant 0 : i32
    %c0_i32_1 = arith.constant 0 : i32
    return %c0_i32, %c0_i32_0 : i32, i32
  }
  func.func @transform_6(%arg0: i32) -> (i32, i32) {
    %c0_i32 = arith.constant 0 : i32
    %c0_i32_0 = arith.constant 0 : i32
    %c0_i32_1 = arith.constant 0 : i32
    return %c0_i32, %c0_i32_0 : i32, i32
  }
  func.func @transform_7(%arg0: i32) -> (i32, i32) {
    %c0_i32 = arith.constant 0 : i32
    %c0_i32_0 = arith.constant 0 : i32
    %c0_i32_1 = arith.constant 0 : i32
    return %c0_i32, %c0_i32_0 : i32, i32
  }
  func.func @transform_8(%arg0: i32) -> (i32, i32) {
    %c0_i32 = arith.constant 0 : i32
    %c0_i32_0 = arith.constant 0 : i32
    %c0_i32_1 = arith.constant 0 : i32
    return %c0_i32, %c0_i32_0 : i32, i32
  }
  func.func @transform_9(%arg0: i32) -> (i32, i32) {
    %c0_i32 = arith.constant 0 : i32
    %c0_i32_0 = arith.constant 0 : i32
    return %arg0, %c0_i32 : i32, i32
  }
}

</mosaic_0001>

<llo_original>
// kernel: tpu_custom_call.1
$region0: #{tpu_custom_call.1}
  #allocation0 [shape = 'u32[]', space=smem, size = 0x4, offset = 0x4, fixed_abs, tag = 'smem constant byte address 0x4 - core index']
  #allocation1 [shape = 'u32[144,128]{1,0:T(1,128)}', space=vmem, size = 0x12000, scoped, tag = 'internal scratch']
  %s0 = inlined_call_operand.hbm [shape: f32[16,6144], index: 0, kind: input, shape index: {}]
  %s1 = inlined_call_operand.hbm [shape: bf16[768,768], index: 1, kind: input, shape index: {}]
  %s2 = inlined_call_operand.hbm [shape: f32[1,768], index: 2, kind: input, shape index: {}]
  %s3 = inlined_call_operand.vmem [shape: bf16[768,64], index: 3, kind: input, shape index: {}]
  %s4 = inlined_call_operand.hbm [shape: f32[1,64], index: 4, kind: input, shape index: {}]
  %s5 = inlined_call_operand.vmem [shape: f32[64,8], index: 5, kind: input, shape index: {}]
  %s6 = inlined_call_operand.hbm [shape: f32[1,8], index: 6, kind: input, shape index: {}]
  %s7 = inlined_call_operand.hbm [shape: f32[8,128], index: 7, kind: input, shape index: {}]
  %s8 = inlined_call_operand.hbm [shape: f32[1,128], index: 8, kind: input, shape index: {}]
  %s9 = inlined_call_operand.hbm [shape: f32[16,128], index: 9, kind: output, shape index: {}]
  %s10 = sld [smem:[#allocation0]]
  $region74: #{tpu_custom_call.1} parent=0
    _
  %s12 = ssub.s32 1, %s10
  %s13 = scalar_select 0, %s12, %s10
  $region1: #{tpu_custom_call.1} parent=0
    #allocation2 [shape = 'u8[49152]{0}', space=vmem, size = 0xc000, scoped, tag = 'input window, operand 0, single buffered']
    #allocation3 [shape = 's32[1]{0}', space=sflag, size = 0x4, scoped, tag = 'scoped memory for tpu_custom_call.1']
    #allocation4 [shape = 's32[1]{0}', space=sflag, size = 0x4, scoped, tag = 'scoped memory for tpu_custom_call.1']
    #allocation5 [shape = 'u8[1179648]{0}', space=vmem, size = 0x120000, scoped, tag = 'input window, operand 1, single buffered']
    #allocation6 [shape = 's32[1]{0}', space=sflag, size = 0x4, scoped, tag = 'scoped memory for tpu_custom_call.1']
    #allocation7 [shape = 'u8[3072]{0}', space=vmem, size = 0xc00, scoped, tag = 'input window, operand 2, single buffered']
    #allocation8 [shape = 'u8[512]{0}', space=vmem, size = 0x400, scoped, tag = 'input window, operand 4, single buffered']
    #allocation9 [shape = 's32[1]{0}', space=sflag, size = 0x4, scoped, tag = 'scoped memory for tpu_custom_call.1']
    #allocation10 [shape = 'u8[512]{0}', space=vmem, size = 0x400, scoped, tag = 'input window, operand 6, single buffered']
    #allocation11 [shape = 'u8[4096]{0}', space=vmem, size = 0x1000, scoped, tag = 'input window, operand 7, single buffered']
    #allocation12 [shape = 's32[1]{0}', space=sflag, size = 0x4, scoped, tag = 'scoped memory for tpu_custom_call.1']
    #allocation13 [shape = 'u8[512]{0}', space=vmem, size = 0x400, scoped, tag = 'input window, operand 8, single buffered']
    #allocation14 [shape = 'u8[8192]{0}', space=vmem, size = 0x2000, scoped, tag = 'output window, operand 0, single buffered']
    %14 = vsyncpa [#allocation3], 0
    %15 = vsyncpa [#allocation6], 0
    %16 = vsyncpa [#allocation9], 0
    %17 = vsyncpa [#allocation12], 0
    %18 = vsyncpa [#allocation4], 0
    // Predicated region
    $region2: #{tpu_custom_call.1} parent=1 // pred_check
      _
    $region3: #{tpu_custom_call.1} parent=1 // pred_check_branch
      %20 = sbr.rel (0) target = $region5
    $region4: #{tpu_custom_call.1} parent=1 // pred_region
      %s22 = ssub.s32 1536, 1536
      %23 = vsyncadd [#allocation3], %s22
      %s24 = sshll.u32 [#allocation2], 4
      %s25 = int_to_ptr.vmem [resolvable:$true] %s24
      %30 = dma.hbm_to_vmem [thread:$0]  %s0, 1536, %s25, [#allocation3], 6144, 768, 48
    $region5: #{tpu_custom_call.1} parent=1 // pred_fallthru
      _
    // Predicated region
    $region6: #{tpu_custom_call.1} parent=1 // pred_check
      _
    $region7: #{tpu_custom_call.1} parent=1 // pred_check_branch
      %32 = sbr.rel (0) target = $region9
    $region8: #{tpu_custom_call.1} parent=1 // pred_region
      %s34 = ssub.s32 36864, 36864
      %35 = vsyncadd [#allocation6], %s34
      %s36 = sshll.u32 [#allocation5], 4
      %s37 = int_to_ptr.vmem [resolvable:$true] %s36
      %42 = dma.hbm_to_vmem [thread:$0]  %s1, 36864, %s37, [#allocation6], 384, 384, 24
    $region9: #{tpu_custom_call.1} parent=1 // pred_fallthru
      _
    // Predicated region
    $region10: #{tpu_custom_call.1} parent=1 // pred_check
      _
    $region11: #{tpu_custom_call.1} parent=1 // pred_check_branch
      %44 = sbr.rel (0) target = $region13
    $region12: #{tpu_custom_call.1} parent=1 // pred_region
      %s46 = ssub.s32 96, 96
      %47 = vsyncadd [#allocation6], %s46
      %s49 = sshll.u32 [#allocation7], 4
      %s50 = int_to_ptr.vmem [resolvable:$true] %s49
      %52 = dma.hbm_to_vmem [thread:$0]  %s2, 96, %s50, [#allocation6]
    $region13: #{tpu_custom_call.1} parent=1 // pred_fallthru
      _
    // Predicated region
    $region14: #{tpu_custom_call.1} parent=1 // pred_check
      _
    $region15: #{tpu_custom_call.1} parent=1 // pred_check_branch
      %54 = sbr.rel (0) target = $region17
    $region16: #{tpu_custom_call.1} parent=1 // pred_region
      _
    $region17: #{tpu_custom_call.1} parent=1 // pred_fallthru
      _
    // Predicated region
    $region18: #{tpu_custom_call.1} parent=1 // pred_check
      _
    $region19: #{tpu_custom_call.1} parent=1 // pred_check_branch
      %56 = sbr.rel (0) target = $region21
    $region20: #{tpu_custom_call.1} parent=1 // pred_region
      %s58 = ssub.s32 16, 16
      %59 = vsyncadd [#allocation9], %s58
      %s61 = sshll.u32 [#allocation8], 4
      %s62 = int_to_ptr.vmem [resolvable:$true] %s61
      %64 = dma.hbm_to_vmem [thread:$0]  %s4, 16, %s62, [#allocation9]
    $region21: #{tpu_custom_call.1} parent=1 // pred_fallthru
      _
    // Predicated region
    $region22: #{tpu_custom_call.1} parent=1 // pred_check
      _
    $region23: #{tpu_custom_call.1} parent=1 // pred_check_branch
      %66 = sbr.rel (0) target = $region25
    $region24: #{tpu_custom_call.1} parent=1 // pred_region
      _
    $region25: #{tpu_custom_call.1} parent=1 // pred_fallthru
      _
    // Predicated region
    $region26: #{tpu_custom_call.1} parent=1 // pred_check
      _
    $region27: #{tpu_custom_call.1} parent=1 // pred_check_branch
      %68 = sbr.rel (0) target = $region29
    $region28: #{tpu_custom_call.1} parent=1 // pred_region
      %s70 = ssub.s32 16, 16
      %71 = vsyncadd [#allocation9], %s70
      %s73 = sshll.u32 [#allocation10], 4
      %s74 = int_to_ptr.vmem [resolvable:$true] %s73
      %76 = dma.hbm_to_vmem [thread:$0]  %s6, 16, %s74, [#allocation9]
    $region29: #{tpu_custom_call.1} parent=1 // pred_fallthru
      _
    // Predicated region
    $region30: #{tpu_custom_call.1} parent=1 // pred_check
      _
    $region31: #{tpu_custom_call.1} parent=1 // pred_check_branch
      %78 = sbr.rel (0) target = $region33
    $region32: #{tpu_custom_call.1} parent=1 // pred_region
      %s80 = ssub.s32 128, 128
      %81 = vsyncadd [#allocation12], %s80
      %s83 = sshll.u32 [#allocation11], 4
      %s84 = int_to_ptr.vmem [resolvable:$true] %s83
      %86 = dma.hbm_to_vmem [thread:$0]  %s7, 128, %s84, [#allocation12]
    $region33: #{tpu_custom_call.1} parent=1 // pred_fallthru
      _
    // Predicated region
    $region34: #{tpu_custom_call.1} parent=1 // pred_check
      _
    $region35: #{tpu_custom_call.1} parent=1 // pred_check_branch
      %88 = sbr.rel (0) target = $region37
    $region36: #{tpu_custom_call.1} parent=1 // pred_region
      %s90 = ssub.s32 16, 16
      %91 = vsyncadd [#allocation12], %s90
      %s93 = sshll.u32 [#allocation13], 4
      %s94 = int_to_ptr.vmem [resolvable:$true] %s93
      %96 = dma.hbm_to_vmem [thread:$0]  %s8, 16, %s94, [#allocation12]
    $region37: #{tpu_custom_call.1} parent=1 // pred_fallthru
      _
    // Predicated region
    $region38: #{tpu_custom_call.1} parent=1 // pred_check
      _
    $region39: #{tpu_custom_call.1} parent=1 // pred_check_branch
      %98 = sbr.rel (0) target = $region41
    $region40: #{tpu_custom_call.1} parent=1 // pred_region
      %99 = dma.done [#allocation3], 1536
    $region41: #{tpu_custom_call.1} parent=1 // pred_fallthru
      _
    // Predicated region
    $region42: #{tpu_custom_call.1} parent=1 // pred_check
      _
    $region43: #{tpu_custom_call.1} parent=1 // pred_check_branch
      %101 = sbr.rel (0) target = $region45
    $region44: #{tpu_custom_call.1} parent=1 // pred_region
      %102 = dma.done [#allocation6], 36864
    $region45: #{tpu_custom_call.1} parent=1 // pred_fallthru
      _
    // Predicated region
    $region46: #{tpu_custom_call.1} parent=1 // pred_check
      _
    $region47: #{tpu_custom_call.1} parent=1 // pred_check_branch
      %104 = sbr.rel (0) target = $region49
    $region48: #{tpu_custom_call.1} parent=1 // pred_region
      %105 = dma.done [#allocation6], 96
    $region49: #{tpu_custom_call.1} parent=1 // pred_fallthru
      _
    // Predicated region
    $region50: #{tpu_custom_call.1} parent=1 // pred_check
      _
    $region51: #{tpu_custom_call.1} parent=1 // pred_check_branch
      %107 = sbr.rel (0) target = $region53
    $region52: #{tpu_custom_call.1} parent=1 // pred_region
      %108 = dma.done [#allocation9], 16
    $region53: #{tpu_custom_call.1} parent=1 // pred_fallthru
      _
    // Predicated region
    $region54: #{tpu_custom_call.1} parent=1 // pred_check
      _
    $region55: #{tpu_custom_call.1} parent=1 // pred_check_branch
      %110 = sbr.rel (0) target = $region57
    $region56: #{tpu_custom_call.1} parent=1 // pred_region
      %111 = dma.done [#allocation9], 16
    $region57: #{tpu_custom_call.1} parent=1 // pred_fallthru
      _
    // Predicated region
    $region58: #{tpu_custom_call.1} parent=1 // pred_check
      _
    $region59: #{tpu_custom_call.1} parent=1 // pred_check_branch
      %113 = sbr.rel (0) target = $region61
    $region60: #{tpu_custom_call.1} parent=1 // pred_region
      %114 = dma.done [#allocation12], 128
    $region61: #{tpu_custom_call.1} parent=1 // pred_fallthru
      _
    // Predicated region
    $region62: #{tpu_custom_call.1} parent=1 // pred_check
      _
    $region63: #{tpu_custom_call.1} parent=1 // pred_check_branch
      %116 = sbr.rel (0) target = $region65
    $region64: #{tpu_custom_call.1} parent=1 // pred_region
      %117 = dma.done [#allocation12], 16
    $region65: #{tpu_custom_call.1} parent=1 // pred_fallthru
      _
    %v119 = vld [vmem:[#allocation2] sm:$0xff]
    %v120 = vld [vmem:[#allocation2 + $0x8] sm:$0xff]
    %v121 = vld [vmem:[#allocation2 + $0x10] sm:$0xff]
    %v122 = vld [vmem:[#allocation2 + $0x18] sm:$0xff]
    %v123 = vld [vmem:[#allocation2 + $0x20] sm:$0xff]
    %v124 = vld [vmem:[#allocation2 + $0x28] sm:$0xff]
    %v125 = vld [vmem:[#allocation2 + $0x30] sm:$0xff]
    %v126 = vld [vmem:[#allocation2 + $0x38] sm:$0xff]
    %v127 = vld [vmem:[#allocation2 + $0x40] sm:$0xff]
    %v128 = vld [vmem:[#allocation2 + $0x48] sm:$0xff]
    %v129 = vld [vmem:[#allocation2 + $0x50] sm:$0xff]
    %v130 = vld [vmem:[#allocation2 + $0x58] sm:$0xff]
    %v131 = vpack.c.bf16 %v125, %v119
    %v132 = vpack.c.bf16 %v126, %v120
    %v133 = vpack.c.bf16 %v127, %v121
    %v134 = vpack.c.bf16 %v128, %v122
    %v135 = vpack.c.bf16 %v129, %v123
    %v136 = vpack.c.bf16 %v130, %v124
    %v137 = vld [vmem:[#allocation5] sm:$0xff]
    %v138 = vld [vmem:[#allocation5 + $0x8] sm:$0xff]
    %v139 = vld [vmem:[#allocation5 + $0x10] sm:$0xff]
    %v140 = vld [vmem:[#allocation5 + $0x18] sm:$0xff]
    %v141 = vld [vmem:[#allocation5 + $0x20] sm:$0xff]
    %v142 = vld [vmem:[#allocation5 + $0x28] sm:$0xff]
    %v143 = vld [vmem:[#allocation5 + $0x30] sm:$0xff]
    %v144 = vld [vmem:[#allocation5 + $0x38] sm:$0xff]
    %v145 = vld [vmem:[#allocation5 + $0x40] sm:$0xff]
    %v146 = vld [vmem:[#allocation5 + $0x48] sm:$0xff]
    %v147 = vld [vmem:[#allocation5 + $0x50] sm:$0xff]
    %v148 = vld [vmem:[#allocation5 + $0x58] sm:$0xff]
    %v149 = vld [vmem:[#allocation5 + $0x60] sm:$0xff]
    %v150 = vld [vmem:[#allocation5 + $0x68] sm:$0xff]
    %v151 = vld [vmem:[#allocation5 + $0x70] sm:$0xff]
    %v152 = vld [vmem:[#allocation5 + $0x78] sm:$0xff]
    %v153 = vld [vmem:[#allocation5 + $0x80] sm:$0xff]
    %v154 = vld [vmem:[#allocation5 + $0x88] sm:$0xff]
    %v155 = vld [vmem:[#allocation5 + $0x90] sm:$0xff]
    %v156 = vld [vmem:[#allocation5 + $0x98] sm:$0xff]
    %v157 = vld [vmem:[#allocation5 + $0xa0] sm:$0xff]
    %v158 = vld [vmem:[#allocation5 + $0xa8] sm:$0xff]
    %v159 = vld [vmem:[#allocation5 + $0xb0] sm:$0xff]
    %v160 = vld [vmem:[#allocation5 + $0xb8] sm:$0xff]
    %v161 = vld [vmem:[#allocation5 + $0xc0] sm:$0xff]
    %v162 = vld [vmem:[#allocation5 + $0xc8] sm:$0xff]
    %v163 = vld [vmem:[#allocation5 + $0xd0] sm:$0xff]
    %v164 = vld [vmem:[#allocation5 + $0xd8] sm:$0xff]
    %v165 = vld [vmem:[#allocation5 + $0xe0] sm:$0xff]
    %v166 = vld [vmem:[#allocation5 + $0xe8] sm:$0xff]
    %v167 = vld [vmem:[#allocation5 + $0xf0] sm:$0xff]
    %v168 = vld [vmem:[#allocation5 + $0xf8] sm:$0xff]
    %v169 = vld [vmem:[#allocation5 + $0x100] sm:$0xff]
    %v170 = vld [vmem:[#allocation5 + $0x108] sm:$0xff]
    %v171 = vld [vmem:[#allocation5 + $0x110] sm:$0xff]
    %v172 = vld [vmem:[#allocation5 + $0x118] sm:$0xff]
    %v173 = vld [vmem:[#allocation5 + $0x120] sm:$0xff]
    %v174 = vld [vmem:[#allocation5 + $0x128] sm:$0xff]
    %v175 = vld [vmem:[#allocation5 + $0x130] sm:$0xff]
    %v176 = vld [vmem:[#allocation5 + $0x138] sm:$0xff]
    %v177 = vld [vmem:[#allocation5 + $0x140] sm:$0xff]
    %v178 = vld [vmem:[#allocation5 + $0x148] sm:$0xff]
    %v179 = vld [vmem:[#allocation5 + $0x150] sm:$0xff]
    %v180 = vld [vmem:[#allocation5 + $0x158] sm:$0xff]
    %v181 = vld [vmem:[#allocation5 + $0x160] sm:$0xff]
    %v182 = vld [vmem:[#allocation5 + $0x168] sm:$0xff]
    %v183 = vld [vmem:[#allocation5 + $0x170] sm:$0xff]
    %v184 = vld [vmem:[#allocation5 + $0x178] sm:$0xff]
    %v185 = vld [vmem:[#allocation5 + $0x180] sm:$0xff]
    %v186 = vld [vmem:[#allocation5 + $0x188] sm:$0xff]
    %v187 = vld [vmem:[#allocation5 + $0x190] sm:$0xff]
    %v188 = vld [vmem:[#allocation5 + $0x198] sm:$0xff]
    %v189 = vld [vmem:[#allocation5 + $0x1a0] sm:$0xff]
    %v190 = vld [vmem:[#allocation5 + $0x1a8] sm:$0xff]
    %v191 = vld [vmem:[#allocation5 + $0x1b0] sm:$0xff]
    %v192 = vld [vmem:[#allocation5 + $0x1b8] sm:$0xff]
    %v193 = vld [vmem:[#allocation5 + $0x1c0] sm:$0xff]
    %v194 = vld [vmem:[#allocation5 + $0x1c8] sm:$0xff]
    %v195 = vld [vmem:[#allocation5 + $0x1d0] sm:$0xff]
    %v196 = vld [vmem:[#allocation5 + $0x1d8] sm:$0xff]
    %v197 = vld [vmem:[#allocation5 + $0x1e0] sm:$0xff]
    %v198 = vld [vmem:[#allocation5 + $0x1e8] sm:$0xff]
    %v199 = vld [vmem:[#allocation5 + $0x1f0] sm:$0xff]
    %v200 = vld [vmem:[#allocation5 + $0x1f8] sm:$0xff]
    %v201 = vld [vmem:[#allocation5 + $0x200] sm:$0xff]
    %v202 = vld [vmem:[#allocation5 + $0x208] sm:$0xff]
    %v203 = vld [vmem:[#allocation5 + $0x210] sm:$0xff]
    %v204 = vld [vmem:[#allocation5 + $0x218] sm:$0xff]
    %v205 = vld [vmem:[#allocation5 + $0x220] sm:$0xff]
    %v206 = vld [vmem:[#allocation5 + $0x228] sm:$0xff]
    %v207 = vld [vmem:[#allocation5 + $0x230] sm:$0xff]
    %v208 = vld [vmem:[#allocation5 + $0x238] sm:$0xff]
    %v209 = vld [vmem:[#allocation5 + $0x240] sm:$0xff]
    %v210 = vld [vmem:[#allocation5 + $0x248] sm:$0xff]
    %v211 = vld [vmem:[#allocation5 + $0x250] sm:$0xff]
    %v212 = vld [vmem:[#allocation5 + $0x258] sm:$0xff]
    %v213 = vld [vmem:[#allocation5 + $0x260] sm:$0xff]
    %v214 = vld [vmem:[#allocation5 + $0x268] sm:$0xff]
    %v215 = vld [vmem:[#allocation5 + $0x270] sm:$0xff]
    %v216 = vld [vmem:[#allocation5 + $0x278] sm:$0xff]
    %v217 = vld [vmem:[#allocation5 + $0x280] sm:$0xff]
    %v218 = vld [vmem:[#allocation5 + $0x288] sm:$0xff]
    %v219 = vld [vmem:[#allocation5 + $0x290] sm:$0xff]
    %v220 = vld [vmem:[#allocation5 + $0x298] sm:$0xff]
    %v221 = vld [vmem:[#allocation5 + $0x2a0] sm:$0xff]
    %v222 = vld [vmem:[#allocation5 + $0x2a8] sm:$0xff]
    %v223 = vld [vmem:[#allocation5 + $0x2b0] sm:$0xff]
    %v224 = vld [vmem:[#allocation5 + $0x2b8] sm:$0xff]
    %v225 = vld [vmem:[#allocation5 + $0x2c0] sm:$0xff]
    %v226 = vld [vmem:[#allocation5 + $0x2c8] sm:$0xff]
    %v227 = vld [vmem:[#allocation5 + $0x2d0] sm:$0xff]
    %v228 = vld [vmem:[#allocation5 + $0x2d8] sm:$0xff]
    %v229 = vld [vmem:[#allocation5 + $0x2e0] sm:$0xff]
    %v230 = vld [vmem:[#allocation5 + $0x2e8] sm:$0xff]
    %v231 = vld [vmem:[#allocation5 + $0x2f0] sm:$0xff]
    %v232 = vld [vmem:[#allocation5 + $0x2f8] sm:$0xff]
    %v233 = vld [vmem:[#allocation5 + $0x300] sm:$0xff]
    %v234 = vld [vmem:[#allocation5 + $0x308] sm:$0xff]
    %v235 = vld [vmem:[#allocation5 + $0x310] sm:$0xff]
    %v236 = vld [vmem:[#allocation5 + $0x318] sm:$0xff]
    %v237 = vld [vmem:[#allocation5 + $0x320] sm:$0xff]
    %v238 = vld [vmem:[#allocation5 + $0x328] sm:$0xff]
    %v239 = vld [vmem:[#allocation5 + $0x330] sm:$0xff]
    %v240 = vld [vmem:[#allocation5 + $0x338] sm:$0xff]
    %v241 = vld [vmem:[#allocation5 + $0x340] sm:$0xff]
    %v242 = vld [vmem:[#allocation5 + $0x348] sm:$0xff]
    %v243 = vld [vmem:[#allocation5 + $0x350] sm:$0xff]
    %v244 = vld [vmem:[#allocation5 + $0x358] sm:$0xff]
    %v245 = vld [vmem:[#allocation5 + $0x360] sm:$0xff]
    %v246 = vld [vmem:[#allocation5 + $0x368] sm:$0xff]
    %v247 = vld [vmem:[#allocation5 + $0x370] sm:$0xff]
    %v248 = vld [vmem:[#allocation5 + $0x378] sm:$0xff]
    %v249 = vld [vmem:[#allocation5 + $0x380] sm:$0xff]
    %v250 = vld [vmem:[#allocation5 + $0x388] sm:$0xff]
    %v251 = vld [vmem:[#allocation5 + $0x390] sm:$0xff]
    %v252 = vld [vmem:[#allocation5 + $0x398] sm:$0xff]
    %v253 = vld [vmem:[#allocation5 + $0x3a0] sm:$0xff]
    %v254 = vld [vmem:[#allocation5 + $0x3a8] sm:$0xff]
    %v255 = vld [vmem:[#allocation5 + $0x3b0] sm:$0xff]
    %v256 = vld [vmem:[#allocation5 + $0x3b8] sm:$0xff]
    %v257 = vld [vmem:[#allocation5 + $0x3c0] sm:$0xff]
    %v258 = vld [vmem:[#allocation5 + $0x3c8] sm:$0xff]
    %v259 = vld [vmem:[#allocation5 + $0x3d0] sm:$0xff]
    %v260 = vld [vmem:[#allocation5 + $0x3d8] sm:$0xff]
    %v261 = vld [vmem:[#allocation5 + $0x3e0] sm:$0xff]
    %v262 = vld [vmem:[#allocation5 + $0x3e8] sm:$0xff]
    %v263 = vld [vmem:[#allocation5 + $0x3f0] sm:$0xff]
    %v264 = vld [vmem:[#allocation5 + $0x3f8] sm:$0xff]
    %v265 = vld [vmem:[#allocation5 + $0x400] sm:$0xff]
    %v266 = vld [vmem:[#allocation5 + $0x408] sm:$0xff]
    %v267 = vld [vmem:[#allocation5 + $0x410] sm:$0xff]
    %v268 = vld [vmem:[#allocation5 + $0x418] sm:$0xff]
    %v269 = vld [vmem:[#allocation5 + $0x420] sm:$0xff]
    %v270 = vld [vmem:[#allocation5 + $0x428] sm:$0xff]
    %v271 = vld [vmem:[#allocation5 + $0x430] sm:$0xff]
    %v272 = vld [vmem:[#allocation5 + $0x438] sm:$0xff]
    %v273 = vld [vmem:[#allocation5 + $0x440] sm:$0xff]
    %v274 = vld [vmem:[#allocation5 + $0x448] sm:$0xff]
    %v275 = vld [vmem:[#allocation5 + $0x450] sm:$0xff]
    %v276 = vld [vmem:[#allocation5 + $0x458] sm:$0xff]
    %v277 = vld [vmem:[#allocation5 + $0x460] sm:$0xff]
    %v278 = vld [vmem:[#allocation5 + $0x468] sm:$0xff]
    %v279 = vld [vmem:[#allocation5 + $0x470] sm:$0xff]
    %v280 = vld [vmem:[#allocation5 + $0x478] sm:$0xff]
    %v281 = vld [vmem:[#allocation5 + $0x480] sm:$0xff]
    %v282 = vld [vmem:[#allocation5 + $0x488] sm:$0xff]
    %v283 = vld [vmem:[#allocation5 + $0x490] sm:$0xff]
    %v284 = vld [vmem:[#allocation5 + $0x498] sm:$0xff]
    %v285 = vld [vmem:[#allocation5 + $0x4a0] sm:$0xff]
    %v286 = vld [vmem:[#allocation5 + $0x4a8] sm:$0xff]
    %v287 = vld [vmem:[#allocation5 + $0x4b0] sm:$0xff]
    %v288 = vld [vmem:[#allocation5 + $0x4b8] sm:$0xff]
    %v289 = vld [vmem:[#allocation5 + $0x4c0] sm:$0xff]
    %v290 = vld [vmem:[#allocation5 + $0x4c8] sm:$0xff]
    %v291 = vld [vmem:[#allocation5 + $0x4d0] sm:$0xff]
    %v292 = vld [vmem:[#allocation5 + $0x4d8] sm:$0xff]
    %v293 = vld [vmem:[#allocation5 + $0x4e0] sm:$0xff]
    %v294 = vld [vmem:[#allocation5 + $0x4e8] sm:$0xff]
    %v295 = vld [vmem:[#allocation5 + $0x4f0] sm:$0xff]
    %v296 = vld [vmem:[#allocation5 + $0x4f8] sm:$0xff]
    %v297 = vld [vmem:[#allocation5 + $0x500] sm:$0xff]
    %v298 = vld [vmem:[#allocation5 + $0x508] sm:$0xff]
    %v299 = vld [vmem:[#allocation5 + $0x510] sm:$0xff]
    %v300 = vld [vmem:[#allocation5 + $0x518] sm:$0xff]
    %v301 = vld [vmem:[#allocation5 + $0x520] sm:$0xff]
    %v302 = vld [vmem:[#allocation5 + $0x528] sm:$0xff]
    %v303 = vld [vmem:[#allocation5 + $0x530] sm:$0xff]
    %v304 = vld [vmem:[#allocation5 + $0x538] sm:$0xff]
    %v305 = vld [vmem:[#allocation5 + $0x540] sm:$0xff]
    %v306 = vld [vmem:[#allocation5 + $0x548] sm:$0xff]
    %v307 = vld [vmem:[#allocation5 + $0x550] sm:$0xff]
    %v308 = vld [vmem:[#allocation5 + $0x558] sm:$0xff]
    %v309 = vld [vmem:[#allocation5 + $0x560] sm:$0xff]
    %v310 = vld [vmem:[#allocation5 + $0x568] sm:$0xff]
    %v311 = vld [vmem:[#allocation5 + $0x570] sm:$0xff]
    %v312 = vld [vmem:[#allocation5 + $0x578] sm:$0xff]
    %v313 = vld [vmem:[#allocation5 + $0x580] sm:$0xff]
    %v314 = vld [vmem:[#allocation5 + $0x588] sm:$0xff]
    %v315 = vld [vmem:[#allocation5 + $0x590] sm:$0xff]
    %v316 = vld [vmem:[#allocation5 + $0x598] sm:$0xff]
    %v317 = vld [vmem:[#allocation5 + $0x5a0] sm:$0xff]
    %v318 = vld [vmem:[#allocation5 + $0x5a8] sm:$0xff]
    %v319 = vld [vmem:[#allocation5 + $0x5b0] sm:$0xff]
    %v320 = vld [vmem:[#allocation5 + $0x5b8] sm:$0xff]
    %v321 = vld [vmem:[#allocation5 + $0x5c0] sm:$0xff]
    %v322 = vld [vmem:[#allocation5 + $0x5c8] sm:$0xff]
    %v323 = vld [vmem:[#allocation5 + $0x5d0] sm:$0xff]
    %v324 = vld [vmem:[#allocation5 + $0x5d8] sm:$0xff]
    %v325 = vld [vmem:[#allocation5 + $0x5e0] sm:$0xff]
    %v326 = vld [vmem:[#allocation5 + $0x5e8] sm:$0xff]
    %v327 = vld [vmem:[#allocation5 + $0x5f0] sm:$0xff]
    %v328 = vld [vmem:[#allocation5 + $0x5f8] sm:$0xff]
    %v329 = vld [vmem:[#allocation5 + $0x600] sm:$0xff]
    %v330 = vld [vmem:[#allocation5 + $0x608] sm:$0xff]
    %v331 = vld [vmem:[#allocation5 + $0x610] sm:$0xff]
    %v332 = vld [vmem:[#allocation5 + $0x618] sm:$0xff]
    %v333 = vld [vmem:[#allocation5 + $0x620] sm:$0xff]
    %v334 = vld [vmem:[#allocation5 + $0x628] sm:$0xff]
    %v335 = vld [vmem:[#allocation5 + $0x630] sm:$0xff]
    %v336 = vld [vmem:[#allocation5 + $0x638] sm:$0xff]
    %v337 = vld [vmem:[#allocation5 + $0x640] sm:$0xff]
    %v338 = vld [vmem:[#allocation5 + $0x648] sm:$0xff]
    %v339 = vld [vmem:[#allocation5 + $0x650] sm:$0xff]
    %v340 = vld [vmem:[#allocation5 + $0x658] sm:$0xff]
    %v341 = vld [vmem:[#allocation5 + $0x660] sm:$0xff]
    %v342 = vld [vmem:[#allocation5 + $0x668] sm:$0xff]
    %v343 = vld [vmem:[#allocation5 + $0x670] sm:$0xff]
    %v344 = vld [vmem:[#allocation5 + $0x678] sm:$0xff]
    %v345 = vld [vmem:[#allocation5 + $0x680] sm:$0xff]
    %v346 = vld [vmem:[#allocation5 + $0x688] sm:$0xff]
    %v347 = vld [vmem:[#allocation5 + $0x690] sm:$0xff]
    %v348 = vld [vmem:[#allocation5 + $0x698] sm:$0xff]
    %v349 = vld [vmem:[#allocation5 + $0x6a0] sm:$0xff]
    %v350 = vld [vmem:[#allocation5 + $0x6a8] sm:$0xff]
    %v351 = vld [vmem:[#allocation5 + $0x6b0] sm:$0xff]
    %v352 = vld [vmem:[#allocation5 + $0x6b8] sm:$0xff]
    %v353 = vld [vmem:[#allocation5 + $0x6c0] sm:$0xff]
    %v354 = vld [vmem:[#allocation5 + $0x6c8] sm:$0xff]
    %v355 = vld [vmem:[#allocation5 + $0x6d0] sm:$0xff]
    %v356 = vld [vmem:[#allocation5 + $0x6d8] sm:$0xff]
    %v357 = vld [vmem:[#allocation5 + $0x6e0] sm:$0xff]
    %v358 = vld [vmem:[#allocation5 + $0x6e8] sm:$0xff]
    %v359 = vld [vmem:[#allocation5 + $0x6f0] sm:$0xff]
    %v360 = vld [vmem:[#allocation5 + $0x6f8] sm:$0xff]
    %v361 = vld [vmem:[#allocation5 + $0x700] sm:$0xff]
    %v362 = vld [vmem:[#allocation5 + $0x708] sm:$0xff]
    %v363 = vld [vmem:[#allocation5 + $0x710] sm:$0xff]
    %v364 = vld [vmem:[#allocation5 + $0x718] sm:$0xff]
    %v365 = vld [vmem:[#allocation5 + $0x720] sm:$0xff]
    %v366 = vld [vmem:[#allocation5 + $0x728] sm:$0xff]
    %v367 = vld [vmem:[#allocation5 + $0x730] sm:$0xff]
    %v368 = vld [vmem:[#allocation5 + $0x738] sm:$0xff]
    %v369 = vld [vmem:[#allocation5 + $0x740] sm:$0xff]
    %v370 = vld [vmem:[#allocation5 + $0x748] sm:$0xff]
    %v371 = vld [vmem:[#allocation5 + $0x750] sm:$0xff]
    %v372 = vld [vmem:[#allocation5 + $0x758] sm:$0xff]
    %v373 = vld [vmem:[#allocation5 + $0x760] sm:$0xff]
    %v374 = vld [vmem:[#allocation5 + $0x768] sm:$0xff]
    %v375 = vld [vmem:[#allocation5 + $0x770] sm:$0xff]
    %v376 = vld [vmem:[#allocation5 + $0x778] sm:$0xff]
    %v377 = vld [vmem:[#allocation5 + $0x780] sm:$0xff]
    %v378 = vld [vmem:[#allocation5 + $0x788] sm:$0xff]
    %v379 = vld [vmem:[#allocation5 + $0x790] sm:$0xff]
    %v380 = vld [vmem:[#allocation5 + $0x798] sm:$0xff]
    %v381 = vld [vmem:[#allocation5 + $0x7a0] sm:$0xff]
    %v382 = vld [vmem:[#allocation5 + $0x7a8] sm:$0xff]
    %v383 = vld [vmem:[#allocation5 + $0x7b0] sm:$0xff]
    %v384 = vld [vmem:[#allocation5 + $0x7b8] sm:$0xff]
    %v385 = vld [vmem:[#allocation5 + $0x7c0] sm:$0xff]
    %v386 = vld [vmem:[#allocation5 + $0x7c8] sm:$0xff]
    %v387 = vld [vmem:[#allocation5 + $0x7d0] sm:$0xff]
    %v388 = vld [vmem:[#allocation5 + $0x7d8] sm:$0xff]
    %v389 = vld [vmem:[#allocation5 + $0x7e0] sm:$0xff]
    %v390 = vld [vmem:[#allocation5 + $0x7e8] sm:$0xff]
    %v391 = vld [vmem:[#allocation5 + $0x7f0] sm:$0xff]
    %v392 = vld [vmem:[#allocation5 + $0x7f8] sm:$0xff]
    %v393 = vld [vmem:[#allocation5 + $0x800] sm:$0xff]
    %v394 = vld [vmem:[#allocation5 + $0x808] sm:$0xff]
    %v395 = vld [vmem:[#allocation5 + $0x810] sm:$0xff]
    %v396 = vld [vmem:[#allocation5 + $0x818] sm:$0xff]
    %v397 = vld [vmem:[#allocation5 + $0x820] sm:$0xff]
    %v398 = vld [vmem:[#allocation5 + $0x828] sm:$0xff]
    %v399 = vld [vmem:[#allocation5 + $0x830] sm:$0xff]
    %v400 = vld [vmem:[#allocation5 + $0x838] sm:$0xff]
    %v401 = vld [vmem:[#allocation5 + $0x840] sm:$0xff]
    %v402 = vld [vmem:[#allocation5 + $0x848] sm:$0xff]
    %v403 = vld [vmem:[#allocation5 + $0x850] sm:$0xff]
    %v404 = vld [vmem:[#allocation5 + $0x858] sm:$0xff]
    %v405 = vld [vmem:[#allocation5 + $0x860] sm:$0xff]
    %v406 = vld [vmem:[#allocation5 + $0x868] sm:$0xff]
    %v407 = vld [vmem:[#allocation5 + $0x870] sm:$0xff]
    %v408 = vld [vmem:[#allocation5 + $0x878] sm:$0xff]
    %v409 = vld [vmem:[#allocation5 + $0x880] sm:$0xff]
    %v410 = vld [vmem:[#allocation5 + $0x888] sm:$0xff]
    %v411 = vld [vmem:[#allocation5 + $0x890] sm:$0xff]
    %v412 = vld [vmem:[#allocation5 + $0x898] sm:$0xff]
    %v413 = vld [vmem:[#allocation5 + $0x8a0] sm:$0xff]
    %v414 = vld [vmem:[#allocation5 + $0x8a8] sm:$0xff]
    %v415 = vld [vmem:[#allocation5 + $0x8b0] sm:$0xff]
    %v416 = vld [vmem:[#allocation5 + $0x8b8] sm:$0xff]
    %v417 = vld [vmem:[#allocation5 + $0x8c0] sm:$0xff]
    %v418 = vld [vmem:[#allocation5 + $0x8c8] sm:$0xff]
    %v419 = vld [vmem:[#allocation5 + $0x8d0] sm:$0xff]
    %v420 = vld [vmem:[#allocation5 + $0x8d8] sm:$0xff]
    %v421 = vld [vmem:[#allocation5 + $0x8e0] sm:$0xff]
    %v422 = vld [vmem:[#allocation5 + $0x8e8] sm:$0xff]
    %v423 = vld [vmem:[#allocation5 + $0x8f0] sm:$0xff]
    %v424 = vld [vmem:[#allocation5 + $0x8f8] sm:$0xff]
    %v425 = vld [vmem:[#allocation7] sm:$0x3f]
    %v427 = vlaneseq
    %v428 = vshrl.u32 %v427, 7
    %v429 = vsub.s32 0, %v428
    %v430 = vrot.slane %v425, %v429
    %v431 = vlaneseq
    %v432 = vshrl.u32 %v431, 7
    %v433 = vsub.s32 1, %v432
    %v434 = vrot.slane %v425, %v433
    %v435 = vlaneseq
    %v436 = vshrl.u32 %v435, 7
    %v437 = vsub.s32 2, %v436
    %v438 = vrot.slane %v425, %v437
    %v439 = vlaneseq
    %v440 = vshrl.u32 %v439, 7
    %v441 = vsub.s32 3, %v440
    %v442 = vrot.slane %v425, %v441
    %v443 = vlaneseq
    %v444 = vshrl.u32 %v443, 7
    %v445 = vsub.s32 4, %v444
    %v446 = vrot.slane %v425, %v445
    %v447 = vlaneseq
    %v448 = vshrl.u32 %v447, 7
    %v449 = vsub.s32 5, %v448
    %v450 = vrot.slane %v425, %v449
    %v745 = vunpack.c.l.b16 %v137
    %v746 = vunpack.c.h.b16 %v137
    %v747 = vunpack.c.l.b16 %v138
    %v748 = vunpack.c.h.b16 %v138
    %v749 = vunpack.c.l.b16 %v139
    %v750 = vunpack.c.h.b16 %v139
    %v751 = vunpack.c.l.b16 %v140
    %v752 = vunpack.c.h.b16 %v140
    %v753 = vunpack.c.l.b16 %v141
    %v754 = vunpack.c.h.b16 %v141
    %v755 = vunpack.c.l.b16 %v142
    %v756 = vunpack.c.h.b16 %v142
    %v757 = vunpack.c.l.b16 %v143
    %v758 = vunpack.c.h.b16 %v143
    %v759 = vunpack.c.l.b16 %v144
    %v760 = vunpack.c.h.b16 %v144
    %v761 = vunpack.c.l.b16 %v145
    %v762 = vunpack.c.h.b16 %v145
    %v763 = vunpack.c.l.b16 %v146
    %v764 = vunpack.c.h.b16 %v146
    %v765 = vunpack.c.l.b16 %v147
    %v766 = vunpack.c.h.b16 %v147
    %v767 = vunpack.c.l.b16 %v148
    %v768 = vunpack.c.h.b16 %v148
    %v769 = vunpack.c.l.b16 %v149
    %v770 = vunpack.c.h.b16 %v149
    %v771 = vunpack.c.l.b16 %v150
    %v772 = vunpack.c.h.b16 %v150
    %v773 = vunpack.c.l.b16 %v151
    %v774 = vunpack.c.h.b16 %v151
    %v775 = vunpack.c.l.b16 %v152
    %v776 = vunpack.c.h.b16 %v152
    %v777 = vunpack.c.l.b16 %v153
    %v778 = vunpack.c.h.b16 %v153
    %v779 = vunpack.c.l.b16 %v154
    %v780 = vunpack.c.h.b16 %v154
    %v781 = vunpack.c.l.b16 %v155
    %v782 = vunpack.c.h.b16 %v155
    %v783 = vunpack.c.l.b16 %v156
    %v784 = vunpack.c.h.b16 %v156
    %v785 = vunpack.c.l.b16 %v157
    %v786 = vunpack.c.h.b16 %v157
    %v787 = vunpack.c.l.b16 %v158
    %v788 = vunpack.c.h.b16 %v158
    %v789 = vunpack.c.l.b16 %v159
    %v790 = vunpack.c.h.b16 %v159
    %v791 = vunpack.c.l.b16 %v160
    %v792 = vunpack.c.h.b16 %v160
    %v793 = vunpack.c.l.b16 %v161
    %v794 = vunpack.c.h.b16 %v161
    %v795 = vunpack.c.l.b16 %v162
    %v796 = vunpack.c.h.b16 %v162
    %v797 = vunpack.c.l.b16 %v163
    %v798 = vunpack.c.h.b16 %v163
    %v799 = vunpack.c.l.b16 %v164
    %v800 = vunpack.c.h.b16 %v164
    %v801 = vunpack.c.l.b16 %v165
    %v802 = vunpack.c.h.b16 %v165
    %v803 = vunpack.c.l.b16 %v166
    %v804 = vunpack.c.h.b16 %v166
    %v805 = vunpack.c.l.b16 %v167
    %v806 = vunpack.c.h.b16 %v167
    %v807 = vunpack.c.l.b16 %v168
    %v808 = vunpack.c.h.b16 %v168
    %v809 = vunpack.c.l.b16 %v169
    %v810 = vunpack.c.h.b16 %v169
    %v811 = vunpack.c.l.b16 %v170
    %v812 = vunpack.c.h.b16 %v170
    %v813 = vunpack.c.l.b16 %v171
    %v814 = vunpack.c.h.b16 %v171
    %v815 = vunpack.c.l.b16 %v172
    %v816 = vunpack.c.h.b16 %v172
    %v817 = vunpack.c.l.b16 %v173
    %v818 = vunpack.c.h.b16 %v173
    %v819 = vunpack.c.l.b16 %v174
    %v820 = vunpack.c.h.b16 %v174
    %v821 = vunpack.c.l.b16 %v175
    %v822 = vunpack.c.h.b16 %v175
    %v823 = vunpack.c.l.b16 %v176
    %v824 = vunpack.c.h.b16 %v176
    %v825 = vunpack.c.l.b16 %v177
    %v826 = vunpack.c.h.b16 %v177
    %v827 = vunpack.c.l.b16 %v178
    %v828 = vunpack.c.h.b16 %v178
    %v829 = vunpack.c.l.b16 %v179
    %v830 = vunpack.c.h.b16 %v179
    %v831 = vunpack.c.l.b16 %v180
    %v832 = vunpack.c.h.b16 %v180
    %v833 = vunpack.c.l.b16 %v181
    %v834 = vunpack.c.h.b16 %v181
    %v835 = vunpack.c.l.b16 %v182
    %v836 = vunpack.c.h.b16 %v182
    %v837 = vunpack.c.l.b16 %v183
    %v838 = vunpack.c.h.b16 %v183
    %v839 = vunpack.c.l.b16 %v184
    %v840 = vunpack.c.h.b16 %v184
    %v841 = vunpack.c.l.b16 %v185
    %v842 = vunpack.c.h.b16 %v185
    %v843 = vunpack.c.l.b16 %v186
    %v844 = vunpack.c.h.b16 %v186
    %v845 = vunpack.c.l.b16 %v187
    %v846 = vunpack.c.h.b16 %v187
    %v847 = vunpack.c.l.b16 %v188
    %v848 = vunpack.c.h.b16 %v188
    %v849 = vunpack.c.l.b16 %v189
    %v850 = vunpack.c.h.b16 %v189
    %v851 = vunpack.c.l.b16 %v190
    %v852 = vunpack.c.h.b16 %v190
    %v853 = vunpack.c.l.b16 %v191
    %v854 = vunpack.c.h.b16 %v191
    %v855 = vunpack.c.l.b16 %v192
    %v856 = vunpack.c.h.b16 %v192
    %v857 = vunpack.c.l.b16 %v193
    %v858 = vunpack.c.h.b16 %v193
    %v859 = vunpack.c.l.b16 %v194
    %v860 = vunpack.c.h.b16 %v194
    %v861 = vunpack.c.l.b16 %v195
    %v862 = vunpack.c.h.b16 %v195
    %v863 = vunpack.c.l.b16 %v196
    %v864 = vunpack.c.h.b16 %v196
    %v865 = vunpack.c.l.b16 %v197
    %v866 = vunpack.c.h.b16 %v197
    %v867 = vunpack.c.l.b16 %v198
    %v868 = vunpack.c.h.b16 %v198
    %v869 = vunpack.c.l.b16 %v199
    %v870 = vunpack.c.h.b16 %v199
    %v871 = vunpack.c.l.b16 %v200
    %v872 = vunpack.c.h.b16 %v200
    %v873 = vunpack.c.l.b16 %v201
    %v874 = vunpack.c.h.b16 %v201
    %v875 = vunpack.c.l.b16 %v202
    %v876 = vunpack.c.h.b16 %v202
    %v877 = vunpack.c.l.b16 %v203
    %v878 = vunpack.c.h.b16 %v203
    %v879 = vunpack.c.l.b16 %v204
    %v880 = vunpack.c.h.b16 %v204
    %v881 = vunpack.c.l.b16 %v205
    %v882 = vunpack.c.h.b16 %v205
    %v883 = vunpack.c.l.b16 %v206
    %v884 = vunpack.c.h.b16 %v206
    %v885 = vunpack.c.l.b16 %v207
    %v886 = vunpack.c.h.b16 %v207
    %v887 = vunpack.c.l.b16 %v208
    %v888 = vunpack.c.h.b16 %v208
    %v889 = vunpack.c.l.b16 %v209
    %v890 = vunpack.c.h.b16 %v209
    %v891 = vunpack.c.l.b16 %v210
    %v892 = vunpack.c.h.b16 %v210
    %v893 = vunpack.c.l.b16 %v211
    %v894 = vunpack.c.h.b16 %v211
    %v895 = vunpack.c.l.b16 %v212
    %v896 = vunpack.c.h.b16 %v212
    %v897 = vunpack.c.l.b16 %v213
    %v898 = vunpack.c.h.b16 %v213
    %v899 = vunpack.c.l.b16 %v214
    %v900 = vunpack.c.h.b16 %v214
    %v901 = vunpack.c.l.b16 %v215
    %v902 = vunpack.c.h.b16 %v215
    %v903 = vunpack.c.l.b16 %v216
    %v904 = vunpack.c.h.b16 %v216
    %v905 = vunpack.c.l.b16 %v217
    %v906 = vunpack.c.h.b16 %v217
    %v907 = vunpack.c.l.b16 %v218
    %v908 = vunpack.c.h.b16 %v218
    %v909 = vunpack.c.l.b16 %v219
    %v910 = vunpack.c.h.b16 %v219
    %v911 = vunpack.c.l.b16 %v220
    %v912 = vunpack.c.h.b16 %v220
    %v913 = vunpack.c.l.b16 %v221
    %v914 = vunpack.c.h.b16 %v221
    %v915 = vunpack.c.l.b16 %v222
    %v916 = vunpack.c.h.b16 %v222
    %v917 = vunpack.c.l.b16 %v223
    %v918 = vunpack.c.h.b16 %v223
    %v919 = vunpack.c.l.b16 %v224
    %v920 = vunpack.c.h.b16 %v224
    %v921 = vunpack.c.l.b16 %v225
    %v922 = vunpack.c.h.b16 %v225
    %v923 = vunpack.c.l.b16 %v226
    %v924 = vunpack.c.h.b16 %v226
    %v925 = vunpack.c.l.b16 %v227
    %v926 = vunpack.c.h.b16 %v227
    %v927 = vunpack.c.l.b16 %v228
    %v928 = vunpack.c.h.b16 %v228
    %v929 = vunpack.c.l.b16 %v229
    %v930 = vunpack.c.h.b16 %v229
    %v931 = vunpack.c.l.b16 %v230
    %v932 = vunpack.c.h.b16 %v230
    %v933 = vunpack.c.l.b16 %v231
    %v934 = vunpack.c.h.b16 %v231
    %v935 = vunpack.c.l.b16 %v232
    %v936 = vunpack.c.h.b16 %v232
    %v937 = vunpack.c.l.b16 %v233
    %v938 = vunpack.c.h.b16 %v233
    %v939 = vunpack.c.l.b16 %v234
    %v940 = vunpack.c.h.b16 %v234
    %v941 = vunpack.c.l.b16 %v235
    %v942 = vunpack.c.h.b16 %v235
    %v943 = vunpack.c.l.b16 %v236
    %v944 = vunpack.c.h.b16 %v236
    %v945 = vunpack.c.l.b16 %v237
    %v946 = vunpack.c.h.b16 %v237
    %v947 = vunpack.c.l.b16 %v238
    %v948 = vunpack.c.h.b16 %v238
    %v949 = vunpack.c.l.b16 %v239
    %v950 = vunpack.c.h.b16 %v239
    %v951 = vunpack.c.l.b16 %v240
    %v952 = vunpack.c.h.b16 %v240
    %v953 = vunpack.c.l.b16 %v241
    %v954 = vunpack.c.h.b16 %v241
    %v955 = vunpack.c.l.b16 %v242
    %v956 = vunpack.c.h.b16 %v242
    %v957 = vunpack.c.l.b16 %v243
    %v958 = vunpack.c.h.b16 %v243
    %v959 = vunpack.c.l.b16 %v244
    %v960 = vunpack.c.h.b16 %v244
    %v961 = vunpack.c.l.b16 %v245
    %v962 = vunpack.c.h.b16 %v245
    %v963 = vunpack.c.l.b16 %v246
    %v964 = vunpack.c.h.b16 %v246
    %v965 = vunpack.c.l.b16 %v247
    %v966 = vunpack.c.h.b16 %v247
    %v967 = vunpack.c.l.b16 %v248
    %v968 = vunpack.c.h.b16 %v248
    %v969 = vunpack.c.l.b16 %v249
    %v970 = vunpack.c.h.b16 %v249
    %v971 = vunpack.c.l.b16 %v250
    %v972 = vunpack.c.h.b16 %v250
    %v973 = vunpack.c.l.b16 %v251
    %v974 = vunpack.c.h.b16 %v251
    %v975 = vunpack.c.l.b16 %v252
    %v976 = vunpack.c.h.b16 %v252
    %v977 = vunpack.c.l.b16 %v253
    %v978 = vunpack.c.h.b16 %v253
    %v979 = vunpack.c.l.b16 %v254
    %v980 = vunpack.c.h.b16 %v254
    %v981 = vunpack.c.l.b16 %v255
    %v982 = vunpack.c.h.b16 %v255
    %v983 = vunpack.c.l.b16 %v256
    %v984 = vunpack.c.h.b16 %v256
    %v985 = vunpack.c.l.b16 %v257
    %v986 = vunpack.c.h.b16 %v257
    %v987 = vunpack.c.l.b16 %v258
    %v988 = vunpack.c.h.b16 %v258
    %v989 = vunpack.c.l.b16 %v259
    %v990 = vunpack.c.h.b16 %v259
    %v991 = vunpack.c.l.b16 %v260
    %v992 = vunpack.c.h.b16 %v260
    %v993 = vunpack.c.l.b16 %v261
    %v994 = vunpack.c.h.b16 %v261
    %v995 = vunpack.c.l.b16 %v262
    %v996 = vunpack.c.h.b16 %v262
    %v997 = vunpack.c.l.b16 %v263
    %v998 = vunpack.c.h.b16 %v263
    %v999 = vunpack.c.l.b16 %v264
    %v1000 = vunpack.c.h.b16 %v264
    %v1001 = vunpack.c.l.b16 %v265
    %v1002 = vunpack.c.h.b16 %v265
    %v1003 = vunpack.c.l.b16 %v266
    %v1004 = vunpack.c.h.b16 %v266
    %v1005 = vunpack.c.l.b16 %v267
    %v1006 = vunpack.c.h.b16 %v267
    %v1007 = vunpack.c.l.b16 %v268
    %v1008 = vunpack.c.h.b16 %v268
    %v1009 = vunpack.c.l.b16 %v269
    %v1010 = vunpack.c.h.b16 %v269
    %v1011 = vunpack.c.l.b16 %v270
    %v1012 = vunpack.c.h.b16 %v270
    %v1013 = vunpack.c.l.b16 %v271
    %v1014 = vunpack.c.h.b16 %v271
    %v1015 = vunpack.c.l.b16 %v272
    %v1016 = vunpack.c.h.b16 %v272
    %v1017 = vunpack.c.l.b16 %v273
    %v1018 = vunpack.c.h.b16 %v273
    %v1019 = vunpack.c.l.b16 %v274
    %v1020 = vunpack.c.h.b16 %v274
    %v1021 = vunpack.c.l.b16 %v275
    %v1022 = vunpack.c.h.b16 %v275
    %v1023 = vunpack.c.l.b16 %v276
    %v1024 = vunpack.c.h.b16 %v276
    %v1025 = vunpack.c.l.b16 %v277
    %v1026 = vunpack.c.h.b16 %v277
    %v1027 = vunpack.c.l.b16 %v278
    %v1028 = vunpack.c.h.b16 %v278
    %v1029 = vunpack.c.l.b16 %v279
    %v1030 = vunpack.c.h.b16 %v279
    %v1031 = vunpack.c.l.b16 %v280
    %v1032 = vunpack.c.h.b16 %v280
    %v1033 = vunpack.c.l.b16 %v281
    %v1034 = vunpack.c.h.b16 %v281
    %v1035 = vunpack.c.l.b16 %v282
    %v1036 = vunpack.c.h.b16 %v282
    %v1037 = vunpack.c.l.b16 %v283
    %v1038 = vunpack.c.h.b16 %v283
    %v1039 = vunpack.c.l.b16 %v284
    %v1040 = vunpack.c.h.b16 %v284
    %v1041 = vunpack.c.l.b16 %v285
    %v1042 = vunpack.c.h.b16 %v285
    %v1043 = vunpack.c.l.b16 %v286
    %v1044 = vunpack.c.h.b16 %v286
    %v1045 = vunpack.c.l.b16 %v287
    %v1046 = vunpack.c.h.b16 %v287
    %v1047 = vunpack.c.l.b16 %v288
    %v1048 = vunpack.c.h.b16 %v288
    %v1049 = vunpack.c.l.b16 %v289
    %v1050 = vunpack.c.h.b16 %v289
    %v1051 = vunpack.c.l.b16 %v290
    %v1052 = vunpack.c.h.b16 %v290
    %v1053 = vunpack.c.l.b16 %v291
    %v1054 = vunpack.c.h.b16 %v291
    %v1055 = vunpack.c.l.b16 %v292
    %v1056 = vunpack.c.h.b16 %v292
    %v1057 = vunpack.c.l.b16 %v293
    %v1058 = vunpack.c.h.b16 %v293
    %v1059 = vunpack.c.l.b16 %v294
    %v1060 = vunpack.c.h.b16 %v294
    %v1061 = vunpack.c.l.b16 %v295
    %v1062 = vunpack.c.h.b16 %v295
    %v1063 = vunpack.c.l.b16 %v296
    %v1064 = vunpack.c.h.b16 %v296
    %v1065 = vunpack.c.l.b16 %v297
    %v1066 = vunpack.c.h.b16 %v297
    %v1067 = vunpack.c.l.b16 %v298
    %v1068 = vunpack.c.h.b16 %v298
    %v1069 = vunpack.c.l.b16 %v299
    %v1070 = vunpack.c.h.b16 %v299
    %v1071 = vunpack.c.l.b16 %v300
    %v1072 = vunpack.c.h.b16 %v300
    %v1073 = vunpack.c.l.b16 %v301
    %v1074 = vunpack.c.h.b16 %v301
    %v1075 = vunpack.c.l.b16 %v302
    %v1076 = vunpack.c.h.b16 %v302
    %v1077 = vunpack.c.l.b16 %v303
    %v1078 = vunpack.c.h.b16 %v303
    %v1079 = vunpack.c.l.b16 %v304
    %v1080 = vunpack.c.h.b16 %v304
    %v1081 = vunpack.c.l.b16 %v305
    %v1082 = vunpack.c.h.b16 %v305
    %v1083 = vunpack.c.l.b16 %v306
    %v1084 = vunpack.c.h.b16 %v306
    %v1085 = vunpack.c.l.b16 %v307
    %v1086 = vunpack.c.h.b16 %v307
    %v1087 = vunpack.c.l.b16 %v308
    %v1088 = vunpack.c.h.b16 %v308
    %v1089 = vunpack.c.l.b16 %v309
    %v1090 = vunpack.c.h.b16 %v309
    %v1091 = vunpack.c.l.b16 %v310
    %v1092 = vunpack.c.h.b16 %v310
    %v1093 = vunpack.c.l.b16 %v311
    %v1094 = vunpack.c.h.b16 %v311
    %v1095 = vunpack.c.l.b16 %v312
    %v1096 = vunpack.c.h.b16 %v312
    %v1097 = vunpack.c.l.b16 %v313
    %v1098 = vunpack.c.h.b16 %v313
    %v1099 = vunpack.c.l.b16 %v314
    %v1100 = vunpack.c.h.b16 %v314
    %v1101 = vunpack.c.l.b16 %v315
    %v1102 = vunpack.c.h.b16 %v315
    %v1103 = vunpack.c.l.b16 %v316
    %v1104 = vunpack.c.h.b16 %v316
    %v1105 = vunpack.c.l.b16 %v317
    %v1106 = vunpack.c.h.b16 %v317
    %v1107 = vunpack.c.l.b16 %v318
    %v1108 = vunpack.c.h.b16 %v318
    %v1109 = vunpack.c.l.b16 %v319
    %v1110 = vunpack.c.h.b16 %v319
    %v1111 = vunpack.c.l.b16 %v320
    %v1112 = vunpack.c.h.b16 %v320
    %v1113 = vunpack.c.l.b16 %v321
    %v1114 = vunpack.c.h.b16 %v321
    %v1115 = vunpack.c.l.b16 %v322
    %v1116 = vunpack.c.h.b16 %v322
    %v1117 = vunpack.c.l.b16 %v323
    %v1118 = vunpack.c.h.b16 %v323
    %v1119 = vunpack.c.l.b16 %v324
    %v1120 = vunpack.c.h.b16 %v324
    %v1121 = vunpack.c.l.b16 %v325
    %v1122 = vunpack.c.h.b16 %v325
    %v1123 = vunpack.c.l.b16 %v326
    %v1124 = vunpack.c.h.b16 %v326
    %v1125 = vunpack.c.l.b16 %v327
    %v1126 = vunpack.c.h.b16 %v327
    %v1127 = vunpack.c.l.b16 %v328
    %v1128 = vunpack.c.h.b16 %v328
    %v1129 = vunpack.c.l.b16 %v329
    %v1130 = vunpack.c.h.b16 %v329
    %v1131 = vunpack.c.l.b16 %v330
    %v1132 = vunpack.c.h.b16 %v330
    %v1133 = vunpack.c.l.b16 %v331
    %v1134 = vunpack.c.h.b16 %v331
    %v1135 = vunpack.c.l.b16 %v332
    %v1136 = vunpack.c.h.b16 %v332
    %v1137 = vunpack.c.l.b16 %v333
    %v1138 = vunpack.c.h.b16 %v333
    %v1139 = vunpack.c.l.b16 %v334
    %v1140 = vunpack.c.h.b16 %v334
    %v1141 = vunpack.c.l.b16 %v335
    %v1142 = vunpack.c.h.b16 %v335
    %v1143 = vunpack.c.l.b16 %v336
    %v1144 = vunpack.c.h.b16 %v336
    %v1145 = vunpack.c.l.b16 %v337
    %v1146 = vunpack.c.h.b16 %v337
    %v1147 = vunpack.c.l.b16 %v338
    %v1148 = vunpack.c.h.b16 %v338
    %v1149 = vunpack.c.l.b16 %v339
    %v1150 = vunpack.c.h.b16 %v339
    %v1151 = vunpack.c.l.b16 %v340
    %v1152 = vunpack.c.h.b16 %v340
    %v1153 = vunpack.c.l.b16 %v341
    %v1154 = vunpack.c.h.b16 %v341
    %v1155 = vunpack.c.l.b16 %v342
    %v1156 = vunpack.c.h.b16 %v342
    %v1157 = vunpack.c.l.b16 %v343
    %v1158 = vunpack.c.h.b16 %v343
    %v1159 = vunpack.c.l.b16 %v344
    %v1160 = vunpack.c.h.b16 %v344
    %v1161 = vunpack.c.l.b16 %v345
    %v1162 = vunpack.c.h.b16 %v345
    %v1163 = vunpack.c.l.b16 %v346
    %v1164 = vunpack.c.h.b16 %v346
    %v1165 = vunpack.c.l.b16 %v347
    %v1166 = vunpack.c.h.b16 %v347
    %v1167 = vunpack.c.l.b16 %v348
    %v1168 = vunpack.c.h.b16 %v348
    %v1169 = vunpack.c.l.b16 %v349
    %v1170 = vunpack.c.h.b16 %v349
    %v1171 = vunpack.c.l.b16 %v350
    %v1172 = vunpack.c.h.b16 %v350
    %v1173 = vunpack.c.l.b16 %v351
    %v1174 = vunpack.c.h.b16 %v351
    %v1175 = vunpack.c.l.b16 %v352
    %v1176 = vunpack.c.h.b16 %v352
    %v1177 = vunpack.c.l.b16 %v353
    %v1178 = vunpack.c.h.b16 %v353
    %v1179 = vunpack.c.l.b16 %v354
    %v1180 = vunpack.c.h.b16 %v354
    %v1181 = vunpack.c.l.b16 %v355
    %v1182 = vunpack.c.h.b16 %v355
    %v1183 = vunpack.c.l.b16 %v356
    %v1184 = vunpack.c.h.b16 %v356
    %v1185 = vunpack.c.l.b16 %v357
    %v1186 = vunpack.c.h.b16 %v357
    %v1187 = vunpack.c.l.b16 %v358
    %v1188 = vunpack.c.h.b16 %v358
    %v1189 = vunpack.c.l.b16 %v359
    %v1190 = vunpack.c.h.b16 %v359
    %v1191 = vunpack.c.l.b16 %v360
    %v1192 = vunpack.c.h.b16 %v360
    %v1193 = vunpack.c.l.b16 %v361
    %v1194 = vunpack.c.h.b16 %v361
    %v1195 = vunpack.c.l.b16 %v362
    %v1196 = vunpack.c.h.b16 %v362
    %v1197 = vunpack.c.l.b16 %v363
    %v1198 = vunpack.c.h.b16 %v363
    %v1199 = vunpack.c.l.b16 %v364
    %v1200 = vunpack.c.h.b16 %v364
    %v1201 = vunpack.c.l.b16 %v365
    %v1202 = vunpack.c.h.b16 %v365
    %v1203 = vunpack.c.l.b16 %v366
    %v1204 = vunpack.c.h.b16 %v366
    %v1205 = vunpack.c.l.b16 %v367
    %v1206 = vunpack.c.h.b16 %v367
    %v1207 = vunpack.c.l.b16 %v368
    %v1208 = vunpack.c.h.b16 %v368
    %v1209 = vunpack.c.l.b16 %v369
    %v1210 = vunpack.c.h.b16 %v369
    %v1211 = vunpack.c.l.b16 %v370
    %v1212 = vunpack.c.h.b16 %v370
    %v1213 = vunpack.c.l.b16 %v371
    %v1214 = vunpack.c.h.b16 %v371
    %v1215 = vunpack.c.l.b16 %v372
    %v1216 = vunpack.c.h.b16 %v372
    %v1217 = vunpack.c.l.b16 %v373
    %v1218 = vunpack.c.h.b16 %v373
    %v1219 = vunpack.c.l.b16 %v374
    %v1220 = vunpack.c.h.b16 %v374
    %v1221 = vunpack.c.l.b16 %v375
    %v1222 = vunpack.c.h.b16 %v375
    %v1223 = vunpack.c.l.b16 %v376
    %v1224 = vunpack.c.h.b16 %v376
    %v1225 = vunpack.c.l.b16 %v377
    %v1226 = vunpack.c.h.b16 %v377
    %v1227 = vunpack.c.l.b16 %v378
    %v1228 = vunpack.c.h.b16 %v378
    %v1229 = vunpack.c.l.b16 %v379
    %v1230 = vunpack.c.h.b16 %v379
    %v1231 = vunpack.c.l.b16 %v380
    %v1232 = vunpack.c.h.b16 %v380
    %v1233 = vunpack.c.l.b16 %v381
    %v1234 = vunpack.c.h.b16 %v381
    %v1235 = vunpack.c.l.b16 %v382
    %v1236 = vunpack.c.h.b16 %v382
    %v1237 = vunpack.c.l.b16 %v383
    %v1238 = vunpack.c.h.b16 %v383
    %v1239 = vunpack.c.l.b16 %v384
    %v1240 = vunpack.c.h.b16 %v384
    %v1241 = vunpack.c.l.b16 %v385
    %v1242 = vunpack.c.h.b16 %v385
    %v1243 = vunpack.c.l.b16 %v386
    %v1244 = vunpack.c.h.b16 %v386
    %v1245 = vunpack.c.l.b16 %v387
    %v1246 = vunpack.c.h.b16 %v387
    %v1247 = vunpack.c.l.b16 %v388
    %v1248 = vunpack.c.h.b16 %v388
    %v1249 = vunpack.c.l.b16 %v389
    %v1250 = vunpack.c.h.b16 %v389
    %v1251 = vunpack.c.l.b16 %v390
    %v1252 = vunpack.c.h.b16 %v390
    %v1253 = vunpack.c.l.b16 %v391
    %v1254 = vunpack.c.h.b16 %v391
    %v1255 = vunpack.c.l.b16 %v392
    %v1256 = vunpack.c.h.b16 %v392
    %v1257 = vunpack.c.l.b16 %v393
    %v1258 = vunpack.c.h.b16 %v393
    %v1259 = vunpack.c.l.b16 %v394
    %v1260 = vunpack.c.h.b16 %v394
    %v1261 = vunpack.c.l.b16 %v395
    %v1262 = vunpack.c.h.b16 %v395
    %v1263 = vunpack.c.l.b16 %v396
    %v1264 = vunpack.c.h.b16 %v396
    %v1265 = vunpack.c.l.b16 %v397
    %v1266 = vunpack.c.h.b16 %v397
    %v1267 = vunpack.c.l.b16 %v398
    %v1268 = vunpack.c.h.b16 %v398
    %v1269 = vunpack.c.l.b16 %v399
    %v1270 = vunpack.c.h.b16 %v399
    %v1271 = vunpack.c.l.b16 %v400
    %v1272 = vunpack.c.h.b16 %v400
    %v1273 = vunpack.c.l.b16 %v401
    %v1274 = vunpack.c.h.b16 %v401
    %v1275 = vunpack.c.l.b16 %v402
    %v1276 = vunpack.c.h.b16 %v402
    %v1277 = vunpack.c.l.b16 %v403
    %v1278 = vunpack.c.h.b16 %v403
    %v1279 = vunpack.c.l.b16 %v404
    %v1280 = vunpack.c.h.b16 %v404
    %v1281 = vunpack.c.l.b16 %v405
    %v1282 = vunpack.c.h.b16 %v405
    %v1283 = vunpack.c.l.b16 %v406
    %v1284 = vunpack.c.h.b16 %v406
    %v1285 = vunpack.c.l.b16 %v407
    %v1286 = vunpack.c.h.b16 %v407
    %v1287 = vunpack.c.l.b16 %v408
    %v1288 = vunpack.c.h.b16 %v408
    %v1289 = vunpack.c.l.b16 %v409
    %v1290 = vunpack.c.h.b16 %v409
    %v1291 = vunpack.c.l.b16 %v410
    %v1292 = vunpack.c.h.b16 %v410
    %v1293 = vunpack.c.l.b16 %v411
    %v1294 = vunpack.c.h.b16 %v411
    %v1295 = vunpack.c.l.b16 %v412
    %v1296 = vunpack.c.h.b16 %v412
    %v1297 = vunpack.c.l.b16 %v413
    %v1298 = vunpack.c.h.b16 %v413
    %v1299 = vunpack.c.l.b16 %v414
    %v1300 = vunpack.c.h.b16 %v414
    %v1301 = vunpack.c.l.b16 %v415
    %v1302 = vunpack.c.h.b16 %v415
    %v1303 = vunpack.c.l.b16 %v416
    %v1304 = vunpack.c.h.b16 %v416
    %v1305 = vunpack.c.l.b16 %v417
    %v1306 = vunpack.c.h.b16 %v417
    %v1307 = vunpack.c.l.b16 %v418
    %v1308 = vunpack.c.h.b16 %v418
    %v1309 = vunpack.c.l.b16 %v419
    %v1310 = vunpack.c.h.b16 %v419
    %v1311 = vunpack.c.l.b16 %v420
    %v1312 = vunpack.c.h.b16 %v420
    %v1313 = vunpack.c.l.b16 %v421
    %v1314 = vunpack.c.h.b16 %v421
    %v1315 = vunpack.c.l.b16 %v422
    %v1316 = vunpack.c.h.b16 %v422
    %v1317 = vunpack.c.l.b16 %v423
    %v1318 = vunpack.c.h.b16 %v423
    %v1319 = vunpack.c.l.b16 %v424
    %v1320 = vunpack.c.h.b16 %v424
    %v1321 = vpack.c.b16 %v751, %v745
    %v1322 = vpack.c.b16 %v752, %v746
    %v1323 = vpack.c.b16 %v753, %v747
    %v1324 = vpack.c.b16 %v754, %v748
    %v1325 = vpack.c.b16 %v755, %v749
    %v1326 = vpack.c.b16 %v756, %v750
    %v1327 = vpack.c.b16 %v763, %v757
    %v1328 = vpack.c.b16 %v764, %v758
    %v1329 = vpack.c.b16 %v765, %v759
    %v1330 = vpack.c.b16 %v766, %v760
    %v1331 = vpack.c.b16 %v767, %v761
    %v1332 = vpack.c.b16 %v768, %v762
    %v1333 = vpack.c.b16 %v775, %v769
    %v1334 = vpack.c.b16 %v776, %v770
    %v1335 = vpack.c.b16 %v777, %v771
    %v1336 = vpack.c.b16 %v778, %v772
    %v1337 = vpack.c.b16 %v779, %v773
    %v1338 = vpack.c.b16 %v780, %v774
    %v1339 = vpack.c.b16 %v787, %v781
    %v1340 = vpack.c.b16 %v788, %v782
    %v1341 = vpack.c.b16 %v789, %v783
    %v1342 = vpack.c.b16 %v790, %v784
    %v1343 = vpack.c.b16 %v791, %v785
    %v1344 = vpack.c.b16 %v792, %v786
    %v1345 = vpack.c.b16 %v799, %v793
    %v1346 = vpack.c.b16 %v800, %v794
    %v1347 = vpack.c.b16 %v801, %v795
    %v1348 = vpack.c.b16 %v802, %v796
    %v1349 = vpack.c.b16 %v803, %v797
    %v1350 = vpack.c.b16 %v804, %v798
    %v1351 = vpack.c.b16 %v811, %v805
    %v1352 = vpack.c.b16 %v812, %v806
    %v1353 = vpack.c.b16 %v813, %v807
    %v1354 = vpack.c.b16 %v814, %v808
    %v1355 = vpack.c.b16 %v815, %v809
    %v1356 = vpack.c.b16 %v816, %v810
    %v1357 = vpack.c.b16 %v823, %v817
    %v1358 = vpack.c.b16 %v824, %v818
    %v1359 = vpack.c.b16 %v825, %v819
    %v1360 = vpack.c.b16 %v826, %v820
    %v1361 = vpack.c.b16 %v827, %v821
    %v1362 = vpack.c.b16 %v828, %v822
    %v1363 = vpack.c.b16 %v835, %v829
    %v1364 = vpack.c.b16 %v836, %v830
    %v1365 = vpack.c.b16 %v837, %v831
    %v1366 = vpack.c.b16 %v838, %v832
    %v1367 = vpack.c.b16 %v839, %v833
    %v1368 = vpack.c.b16 %v840, %v834
    %v1369 = vpack.c.b16 %v847, %v841
    %v1370 = vpack.c.b16 %v848, %v842
    %v1371 = vpack.c.b16 %v849, %v843
    %v1372 = vpack.c.b16 %v850, %v844
    %v1373 = vpack.c.b16 %v851, %v845
    %v1374 = vpack.c.b16 %v852, %v846
    %v1375 = vpack.c.b16 %v859, %v853
    %v1376 = vpack.c.b16 %v860, %v854
    %v1377 = vpack.c.b16 %v861, %v855
    %v1378 = vpack.c.b16 %v862, %v856
    %v1379 = vpack.c.b16 %v863, %v857
    %v1380 = vpack.c.b16 %v864, %v858
    %v1381 = vpack.c.b16 %v871, %v865
    %v1382 = vpack.c.b16 %v872, %v866
    %v1383 = vpack.c.b16 %v873, %v867
    %v1384 = vpack.c.b16 %v874, %v868
    %v1385 = vpack.c.b16 %v875, %v869
    %v1386 = vpack.c.b16 %v876, %v870
    %v1387 = vpack.c.b16 %v883, %v877
    %v1388 = vpack.c.b16 %v884, %v878
    %v1389 = vpack.c.b16 %v885, %v879
    %v1390 = vpack.c.b16 %v886, %v880
    %v1391 = vpack.c.b16 %v887, %v881
    %v1392 = vpack.c.b16 %v888, %v882
    %v1393 = vpack.c.b16 %v895, %v889
    %v1394 = vpack.c.b16 %v896, %v890
    %v1395 = vpack.c.b16 %v897, %v891
    %v1396 = vpack.c.b16 %v898, %v892
    %v1397 = vpack.c.b16 %v899, %v893
    %v1398 = vpack.c.b16 %v900, %v894
    %v1399 = vpack.c.b16 %v907, %v901
    %v1400 = vpack.c.b16 %v908, %v902
    %v1401 = vpack.c.b16 %v909, %v903
    %v1402 = vpack.c.b16 %v910, %v904
    %v1403 = vpack.c.b16 %v911, %v905
    %v1404 = vpack.c.b16 %v912, %v906
    %v1405 = vpack.c.b16 %v919, %v913
    %v1406 = vpack.c.b16 %v920, %v914
    %v1407 = vpack.c.b16 %v921, %v915
    %v1408 = vpack.c.b16 %v922, %v916
    %v1409 = vpack.c.b16 %v923, %v917
    %v1410 = vpack.c.b16 %v924, %v918
    %v1411 = vpack.c.b16 %v931, %v925
    %v1412 = vpack.c.b16 %v932, %v926
    %v1413 = vpack.c.b16 %v933, %v927
    %v1414 = vpack.c.b16 %v934, %v928
    %v1415 = vpack.c.b16 %v935, %v929
    %v1416 = vpack.c.b16 %v936, %v930
    %v1417 = vpack.c.b16 %v943, %v937
    %v1418 = vpack.c.b16 %v944, %v938
    %v1419 = vpack.c.b16 %v945, %v939
    %v1420 = vpack.c.b16 %v946, %v940
    %v1421 = vpack.c.b16 %v947, %v941
    %v1422 = vpack.c.b16 %v948, %v942
    %v1423 = vpack.c.b16 %v955, %v949
    %v1424 = vpack.c.b16 %v956, %v950
    %v1425 = vpack.c.b16 %v957, %v951
    %v1426 = vpack.c.b16 %v958, %v952
    %v1427 = vpack.c.b16 %v959, %v953
    %v1428 = vpack.c.b16 %v960, %v954
    %v1429 = vpack.c.b16 %v967, %v961
    %v1430 = vpack.c.b16 %v968, %v962
    %v1431 = vpack.c.b16 %v969, %v963
    %v1432 = vpack.c.b16 %v970, %v964
    %v1433 = vpack.c.b16 %v971, %v965
    %v1434 = vpack.c.b16 %v972, %v966
    %v1435 = vpack.c.b16 %v979, %v973
    %v1436 = vpack.c.b16 %v980, %v974
    %v1437 = vpack.c.b16 %v981, %v975
    %v1438 = vpack.c.b16 %v982, %v976
    %v1439 = vpack.c.b16 %v983, %v977
    %v1440 = vpack.c.b16 %v984, %v978
    %v1441 = vpack.c.b16 %v991, %v985
    %v1442 = vpack.c.b16 %v992, %v986
    %v1443 = vpack.c.b16 %v993, %v987
    %v1444 = vpack.c.b16 %v994, %v988
    %v1445 = vpack.c.b16 %v995, %v989
    %v1446 = vpack.c.b16 %v996, %v990
    %v1447 = vpack.c.b16 %v1003, %v997
    %v1448 = vpack.c.b16 %v1004, %v998
    %v1449 = vpack.c.b16 %v1005, %v999
    %v1450 = vpack.c.b16 %v1006, %v1000
    %v1451 = vpack.c.b16 %v1007, %v1001
    %v1452 = vpack.c.b16 %v1008, %v1002
    %v1453 = vpack.c.b16 %v1015, %v1009
    %v1454 = vpack.c.b16 %v1016, %v1010
    %v1455 = vpack.c.b16 %v1017, %v1011
    %v1456 = vpack.c.b16 %v1018, %v1012
    %v1457 = vpack.c.b16 %v1019, %v1013
    %v1458 = vpack.c.b16 %v1020, %v1014
    %v1459 = vpack.c.b16 %v1027, %v1021
    %v1460 = vpack.c.b16 %v1028, %v1022
    %v1461 = vpack.c.b16 %v1029, %v1023
    %v1462 = vpack.c.b16 %v1030, %v1024
    %v1463 = vpack.c.b16 %v1031, %v1025
    %v1464 = vpack.c.b16 %v1032, %v1026
    %v1465 = vpack.c.b16 %v1039, %v1033
    %v1466 = vpack.c.b16 %v1040, %v1034
    %v1467 = vpack.c.b16 %v1041, %v1035
    %v1468 = vpack.c.b16 %v1042, %v1036
    %v1469 = vpack.c.b16 %v1043, %v1037
    %v1470 = vpack.c.b16 %v1044, %v1038
    %v1471 = vpack.c.b16 %v1051, %v1045
    %v1472 = vpack.c.b16 %v1052, %v1046
    %v1473 = vpack.c.b16 %v1053, %v1047
    %v1474 = vpack.c.b16 %v1054, %v1048
    %v1475 = vpack.c.b16 %v1055, %v1049
    %v1476 = vpack.c.b16 %v1056, %v1050
    %v1477 = vpack.c.b16 %v1063, %v1057
    %v1478 = vpack.c.b16 %v1064, %v1058
    %v1479 = vpack.c.b16 %v1065, %v1059
    %v1480 = vpack.c.b16 %v1066, %v1060
    %v1481 = vpack.c.b16 %v1067, %v1061
    %v1482 = vpack.c.b16 %v1068, %v1062
    %v1483 = vpack.c.b16 %v1075, %v1069
    %v1484 = vpack.c.b16 %v1076, %v1070
    %v1485 = vpack.c.b16 %v1077, %v1071
    %v1486 = vpack.c.b16 %v1078, %v1072
    %v1487 = vpack.c.b16 %v1079, %v1073
    %v1488 = vpack.c.b16 %v1080, %v1074
    %v1489 = vpack.c.b16 %v1087, %v1081
    %v1490 = vpack.c.b16 %v1088, %v1082
    %v1491 = vpack.c.b16 %v1089, %v1083
    %v1492 = vpack.c.b16 %v1090, %v1084
    %v1493 = vpack.c.b16 %v1091, %v1085
    %v1494 = vpack.c.b16 %v1092, %v1086
    %v1495 = vpack.c.b16 %v1099, %v1093
    %v1496 = vpack.c.b16 %v1100, %v1094
    %v1497 = vpack.c.b16 %v1101, %v1095
    %v1498 = vpack.c.b16 %v1102, %v1096
    %v1499 = vpack.c.b16 %v1103, %v1097
    %v1500 = vpack.c.b16 %v1104, %v1098
    %v1501 = vpack.c.b16 %v1111, %v1105
    %v1502 = vpack.c.b16 %v1112, %v1106
    %v1503 = vpack.c.b16 %v1113, %v1107
    %v1504 = vpack.c.b16 %v1114, %v1108
    %v1505 = vpack.c.b16 %v1115, %v1109
    %v1506 = vpack.c.b16 %v1116, %v1110
    %v1507 = vpack.c.b16 %v1123, %v1117
    %v1508 = vpack.c.b16 %v1124, %v1118
    %v1509 = vpack.c.b16 %v1125, %v1119
    %v1510 = vpack.c.b16 %v1126, %v1120
    %v1511 = vpack.c.b16 %v1127, %v1121
    %v1512 = vpack.c.b16 %v1128, %v1122
    %v1513 = vpack.c.b16 %v1135, %v1129
    %v1514 = vpack.c.b16 %v1136, %v1130
    %v1515 = vpack.c.b16 %v1137, %v1131
    %v1516 = vpack.c.b16 %v1138, %v1132
    %v1517 = vpack.c.b16 %v1139, %v1133
    %v1518 = vpack.c.b16 %v1140, %v1134
    %v1519 = vpack.c.b16 %v1147, %v1141
    %v1520 = vpack.c.b16 %v1148, %v1142
    %v1521 = vpack.c.b16 %v1149, %v1143
    %v1522 = vpack.c.b16 %v1150, %v1144
    %v1523 = vpack.c.b16 %v1151, %v1145
    %v1524 = vpack.c.b16 %v1152, %v1146
    %v1525 = vpack.c.b16 %v1159, %v1153
    %v1526 = vpack.c.b16 %v1160, %v1154
    %v1527 = vpack.c.b16 %v1161, %v1155
    %v1528 = vpack.c.b16 %v1162, %v1156
    %v1529 = vpack.c.b16 %v1163, %v1157
    %v1530 = vpack.c.b16 %v1164, %v1158
    %v1531 = vpack.c.b16 %v1171, %v1165
    %v1532 = vpack.c.b16 %v1172, %v1166
    %v1533 = vpack.c.b16 %v1173, %v1167
    %v1534 = vpack.c.b16 %v1174, %v1168
    %v1535 = vpack.c.b16 %v1175, %v1169
    %v1536 = vpack.c.b16 %v1176, %v1170
    %v1537 = vpack.c.b16 %v1183, %v1177
    %v1538 = vpack.c.b16 %v1184, %v1178
    %v1539 = vpack.c.b16 %v1185, %v1179
    %v1540 = vpack.c.b16 %v1186, %v1180
    %v1541 = vpack.c.b16 %v1187, %v1181
    %v1542 = vpack.c.b16 %v1188, %v1182
    %v1543 = vpack.c.b16 %v1195, %v1189
    %v1544 = vpack.c.b16 %v1196, %v1190
    %v1545 = vpack.c.b16 %v1197, %v1191
    %v1546 = vpack.c.b16 %v1198, %v1192
    %v1547 = vpack.c.b16 %v1199, %v1193
    %v1548 = vpack.c.b16 %v1200, %v1194
    %v1549 = vpack.c.b16 %v1207, %v1201
    %v1550 = vpack.c.b16 %v1208, %v1202
    %v1551 = vpack.c.b16 %v1209, %v1203
    %v1552 = vpack.c.b16 %v1210, %v1204
    %v1553 = vpack.c.b16 %v1211, %v1205
    %v1554 = vpack.c.b16 %v1212, %v1206
    %v1555 = vpack.c.b16 %v1219, %v1213
    %v1556 = vpack.c.b16 %v1220, %v1214
    %v1557 = vpack.c.b16 %v1221, %v1215
    %v1558 = vpack.c.b16 %v1222, %v1216
    %v1559 = vpack.c.b16 %v1223, %v1217
    %v1560 = vpack.c.b16 %v1224, %v1218
    %v1561 = vpack.c.b16 %v1231, %v1225
    %v1562 = vpack.c.b16 %v1232, %v1226
    %v1563 = vpack.c.b16 %v1233, %v1227
    %v1564 = vpack.c.b16 %v1234, %v1228
    %v1565 = vpack.c.b16 %v1235, %v1229
    %v1566 = vpack.c.b16 %v1236, %v1230
    %v1567 = vpack.c.b16 %v1243, %v1237
    %v1568 = vpack.c.b16 %v1244, %v1238
    %v1569 = vpack.c.b16 %v1245, %v1239
    %v1570 = vpack.c.b16 %v1246, %v1240
    %v1571 = vpack.c.b16 %v1247, %v1241
    %v1572 = vpack.c.b16 %v1248, %v1242
    %v1573 = vpack.c.b16 %v1255, %v1249
    %v1574 = vpack.c.b16 %v1256, %v1250
    %v1575 = vpack.c.b16 %v1257, %v1251
    %v1576 = vpack.c.b16 %v1258, %v1252
    %v1577 = vpack.c.b16 %v1259, %v1253
    %v1578 = vpack.c.b16 %v1260, %v1254
    %v1579 = vpack.c.b16 %v1267, %v1261
    %v1580 = vpack.c.b16 %v1268, %v1262
    %v1581 = vpack.c.b16 %v1269, %v1263
    %v1582 = vpack.c.b16 %v1270, %v1264
    %v1583 = vpack.c.b16 %v1271, %v1265
    %v1584 = vpack.c.b16 %v1272, %v1266
    %v1585 = vpack.c.b16 %v1279, %v1273
    %v1586 = vpack.c.b16 %v1280, %v1274
    %v1587 = vpack.c.b16 %v1281, %v1275
    %v1588 = vpack.c.b16 %v1282, %v1276
    %v1589 = vpack.c.b16 %v1283, %v1277
    %v1590 = vpack.c.b16 %v1284, %v1278
    %v1591 = vpack.c.b16 %v1291, %v1285
    %v1592 = vpack.c.b16 %v1292, %v1286
    %v1593 = vpack.c.b16 %v1293, %v1287
    %v1594 = vpack.c.b16 %v1294, %v1288
    %v1595 = vpack.c.b16 %v1295, %v1289
    %v1596 = vpack.c.b16 %v1296, %v1290
    %v1597 = vpack.c.b16 %v1303, %v1297
    %v1598 = vpack.c.b16 %v1304, %v1298
    %v1599 = vpack.c.b16 %v1305, %v1299
    %v1600 = vpack.c.b16 %v1306, %v1300
    %v1601 = vpack.c.b16 %v1307, %v1301
    %v1602 = vpack.c.b16 %v1308, %v1302
    %v1603 = vpack.c.b16 %v1315, %v1309
    %v1604 = vpack.c.b16 %v1316, %v1310
    %v1605 = vpack.c.b16 %v1317, %v1311
    %v1606 = vpack.c.b16 %v1318, %v1312
    %v1607 = vpack.c.b16 %v1319, %v1313
    %v1608 = vpack.c.b16 %v1320, %v1314
    %1897 = vmatprep.subr.bf16.mxu0 %v1322
    %1898 = vmatpush1.bf16.msra.mxu0 %v1321
    %1899 = vmatprep.subr.bf16.mxu0 %v1328
    %1900 = vmatpush1.bf16.msra.mxu0 %v1327
    %1901 = vmatprep.subr.bf16.mxu0 %v1334
    %1902 = vmatpush1.bf16.msra.mxu0 %v1333
    %1903 = vmatprep.subr.bf16.mxu0 %v1340
    %1904 = vmatpush1.bf16.msra.mxu0 %v1339
    %1905 = vmatprep.subr.bf16.mxu0 %v1346
    %1906 = vmatpush1.bf16.msra.mxu0 %v1345
    %1907 = vmatprep.subr.bf16.mxu0 %v1352
    %1908 = vmatpush1.bf16.msra.mxu0 %v1351
    %1909 = vmatprep.subr.bf16.mxu0 %v1358
    %1910 = vmatpush1.bf16.msra.mxu0 %v1357
    %1911 = vmatprep.subr.bf16.mxu0 %v1364
    %1912 = vmatpush1.bf16.msra.mxu0 %v1363
    %1913 = vmatprep.subr.bf16.mxu0 %v1370
    %1914 = vmatpush1.bf16.msra.mxu0 %v1369
    %1915 = vmatprep.subr.bf16.mxu0 %v1376
    %1916 = vmatpush1.bf16.msra.mxu0 %v1375
    %1917 = vmatprep.subr.bf16.mxu0 %v1382
    %1918 = vmatpush1.bf16.msra.mxu0 %v1381
    %1919 = vmatprep.subr.bf16.mxu0 %v1388
    %1920 = vmatpush1.bf16.msra.mxu0 %v1387
    %1921 = vmatprep.subr.bf16.mxu0 %v1394
    %1922 = vmatpush1.bf16.msra.mxu0 %v1393
    %1923 = vmatprep.subr.bf16.mxu0 %v1400
    %1924 = vmatpush1.bf16.msra.mxu0 %v1399
    %1925 = vmatprep.subr.bf16.mxu0 %v1406
    %1926 = vmatpush1.bf16.msra.mxu0 %v1405
    %1927 = vmatprep.subr.bf16.mxu0 %v1412
    %1928 = vmatpush1.bf16.msra.mxu0 %v1411
    %1929 = vmatprep.mubr.bf16.mxu0 %v132
    %1930 = vmatmul.mubr.bf16.gmra.mrb[0].mxu0 %v131
    %v1931 = vpop.f32.mrb[0].mxu0
    %v1932 = vadd.f32 %v430, %v1931
    %v1933 = vpop.f32.mrb[0].mxu0
    %v1934 = vadd.f32 %v434, %v1933
    %v1935 = vpop.f32.mrb[0].mxu0
    %v1936 = vadd.f32 %v430, %v1935
    %v1937 = vpop.f32.mrb[0].mxu0
    %v1938 = vadd.f32 %v434, %v1937
    %1939 = vdwg.mxu0
    %1940 = vmatprep.subr.bf16.mxu0 %v1418
    %1941 = vmatpush1.bf16.msra.mxu0 %v1417
    %1942 = vmatprep.subr.bf16.mxu0 %v1424
    %1943 = vmatpush1.bf16.msra.mxu0 %v1423
    %1944 = vmatprep.subr.bf16.mxu0 %v1430
    %1945 = vmatpush1.bf16.msra.mxu0 %v1429
    %1946 = vmatprep.subr.bf16.mxu0 %v1436
    %1947 = vmatpush1.bf16.msra.mxu0 %v1435
    %1948 = vmatprep.subr.bf16.mxu0 %v1442
    %1949 = vmatpush1.bf16.msra.mxu0 %v1441
    %1950 = vmatprep.subr.bf16.mxu0 %v1448
    %1951 = vmatpush1.bf16.msra.mxu0 %v1447
    %1952 = vmatprep.subr.bf16.mxu0 %v1454
    %1953 = vmatpush1.bf16.msra.mxu0 %v1453
    %1954 = vmatprep.subr.bf16.mxu0 %v1460
    %1955 = vmatpush1.bf16.msra.mxu0 %v1459
    %1956 = vmatprep.subr.bf16.mxu0 %v1466
    %1957 = vmatpush1.bf16.msra.mxu0 %v1465
    %1958 = vmatprep.subr.bf16.mxu0 %v1472
    %1959 = vmatpush1.bf16.msra.mxu0 %v1471
    %1960 = vmatprep.subr.bf16.mxu0 %v1478
    %1961 = vmatpush1.bf16.msra.mxu0 %v1477
    %1962 = vmatprep.subr.bf16.mxu0 %v1484
    %1963 = vmatpush1.bf16.msra.mxu0 %v1483
    %1964 = vmatprep.subr.bf16.mxu0 %v1490
    %1965 = vmatpush1.bf16.msra.mxu0 %v1489
    %1966 = vmatprep.subr.bf16.mxu0 %v1496
    %1967 = vmatpush1.bf16.msra.mxu0 %v1495
    %1968 = vmatprep.subr.bf16.mxu0 %v1502
    %1969 = vmatpush1.bf16.msra.mxu0 %v1501
    %1970 = vmatprep.subr.bf16.mxu0 %v1508
    %1971 = vmatpush1.bf16.msra.mxu0 %v1507
    %1972 = vmatprep.mubr.bf16.mxu0 %v134
    %1973 = vmatmul.mubr.bf16.gmra.mrb[0].mxu0 %v133
    %v1974 = vpop.f32.mrb[0].mxu0
    %v1975 = vadd.f32 %v1932, %v1974
    %v1976 = vpop.f32.mrb[0].mxu0
    %v1977 = vadd.f32 %v1934, %v1976
    %v1978 = vpop.f32.mrb[0].mxu0
    %v1979 = vadd.f32 %v1936, %v1978
    %v1980 = vpop.f32.mrb[0].mxu0
    %v1981 = vadd.f32 %v1938, %v1980
    %1982 = vdwg.mxu0
    %1983 = vmatprep.subr.bf16.mxu0 %v1514
    %1984 = vmatpush1.bf16.msra.mxu0 %v1513
    %1985 = vmatprep.subr.bf16.mxu0 %v1520
    %1986 = vmatpush1.bf16.msra.mxu0 %v1519
    %1987 = vmatprep.subr.bf16.mxu0 %v1526
    %1988 = vmatpush1.bf16.msra.mxu0 %v1525
    %1989 = vmatprep.subr.bf16.mxu0 %v1532
    %1990 = vmatpush1.bf16.msra.mxu0 %v1531
    %1991 = vmatprep.subr.bf16.mxu0 %v1538
    %1992 = vmatpush1.bf16.msra.mxu0 %v1537
    %1993 = vmatprep.subr.bf16.mxu0 %v1544
    %1994 = vmatpush1.bf16.msra.mxu0 %v1543
    %1995 = vmatprep.subr.bf16.mxu0 %v1550
    %1996 = vmatpush1.bf16.msra.mxu0 %v1549
    %1997 = vmatprep.subr.bf16.mxu0 %v1556
    %1998 = vmatpush1.bf16.msra.mxu0 %v1555
    %1999 = vmatprep.subr.bf16.mxu0 %v1562
    %2000 = vmatpush1.bf16.msra.mxu0 %v1561
    %2001 = vmatprep.subr.bf16.mxu0 %v1568
    %2002 = vmatpush1.bf16.msra.mxu0 %v1567
    %2003 = vmatprep.subr.bf16.mxu0 %v1574
    %2004 = vmatpush1.bf16.msra.mxu0 %v1573
    %2005 = vmatprep.subr.bf16.mxu0 %v1580
    %2006 = vmatpush1.bf16.msra.mxu0 %v1579
    %2007 = vmatprep.subr.bf16.mxu0 %v1586
    %2008 = vmatpush1.bf16.msra.mxu0 %v1585
    %2009 = vmatprep.subr.bf16.mxu0 %v1592
    %2010 = vmatpush1.bf16.msra.mxu0 %v1591
    %2011 = vmatprep.subr.bf16.mxu0 %v1598
    %2012 = vmatpush1.bf16.msra.mxu0 %v1597
    %2013 = vmatprep.subr.bf16.mxu0 %v1604
    %2014 = vmatpush1.bf16.msra.mxu0 %v1603
    %2015 = vmatprep.mubr.bf16.mxu0 %v136
    %2016 = vmatmul.mubr.bf16.gmra.mrb[0].mxu0 %v135
    %v2017 = vpop.f32.mrb[0].mxu0
    %v2018 = vadd.f32 %v1975, %v2017
    %v2019 = vpop.f32.mrb[0].mxu0
    %v2020 = vadd.f32 %v1977, %v2019
    %v2021 = vpop.f32.mrb[0].mxu0
    %v2022 = vadd.f32 %v1979, %v2021
    %v2023 = vpop.f32.mrb[0].mxu0
    %v2024 = vadd.f32 %v1981, %v2023
    %2025 = vdwg.mxu0
    %2026 = vmatprep.subr.bf16.mxu0 %v1324
    %2027 = vmatpush1.bf16.msra.mxu0 %v1323
    %2028 = vmatprep.subr.bf16.mxu0 %v1330
    %2029 = vmatpush1.bf16.msra.mxu0 %v1329
    %2030 = vmatprep.subr.bf16.mxu0 %v1336
    %2031 = vmatpush1.bf16.msra.mxu0 %v1335
    %2032 = vmatprep.subr.bf16.mxu0 %v1342
    %2033 = vmatpush1.bf16.msra.mxu0 %v1341
    %2034 = vmatprep.subr.bf16.mxu0 %v1348
    %2035 = vmatpush1.bf16.msra.mxu0 %v1347
    %2036 = vmatprep.subr.bf16.mxu0 %v1354
    %2037 = vmatpush1.bf16.msra.mxu0 %v1353
    %2038 = vmatprep.subr.bf16.mxu0 %v1360
    %2039 = vmatpush1.bf16.msra.mxu0 %v1359
    %2040 = vmatprep.subr.bf16.mxu0 %v1366
    %2041 = vmatpush1.bf16.msra.mxu0 %v1365
    %2042 = vmatprep.subr.bf16.mxu0 %v1372
    %2043 = vmatpush1.bf16.msra.mxu0 %v1371
    %2044 = vmatprep.subr.bf16.mxu0 %v1378
    %2045 = vmatpush1.bf16.msra.mxu0 %v1377
    %2046 = vmatprep.subr.bf16.mxu0 %v1384
    %2047 = vmatpush1.bf16.msra.mxu0 %v1383
    %2048 = vmatprep.subr.bf16.mxu0 %v1390
    %2049 = vmatpush1.bf16.msra.mxu0 %v1389
    %2050 = vmatprep.subr.bf16.mxu0 %v1396
    %2051 = vmatpush1.bf16.msra.mxu0 %v1395
    %2052 = vmatprep.subr.bf16.mxu0 %v1402
    %2053 = vmatpush1.bf16.msra.mxu0 %v1401
    %2054 = vmatprep.subr.bf16.mxu0 %v1408
    %2055 = vmatpush1.bf16.msra.mxu0 %v1407
    %2056 = vmatprep.subr.bf16.mxu0 %v1414
    %2057 = vmatpush1.bf16.msra.mxu0 %v1413
    %2058 = vmatprep.mubr.bf16.mxu0 %v132
    %2059 = vmatmul.mubr.bf16.gmra.mrb[0].mxu0 %v131
    %v2060 = vpop.f32.mrb[0].mxu0
    %v2061 = vadd.f32 %v438, %v2060
    %v2062 = vpop.f32.mrb[0].mxu0
    %v2063 = vadd.f32 %v442, %v2062
    %v2064 = vpop.f32.mrb[0].mxu0
    %v2065 = vadd.f32 %v438, %v2064
    %v2066 = vpop.f32.mrb[0].mxu0
    %v2067 = vadd.f32 %v442, %v2066
    %2068 = vdwg.mxu0
    %2069 = vmatprep.subr.bf16.mxu0 %v1420
    %2070 = vmatpush1.bf16.msra.mxu0 %v1419
    %2071 = vmatprep.subr.bf16.mxu0 %v1426
    %2072 = vmatpush1.bf16.msra.mxu0 %v1425
    %2073 = vmatprep.subr.bf16.mxu0 %v1432
    %2074 = vmatpush1.bf16.msra.mxu0 %v1431
    %2075 = vmatprep.subr.bf16.mxu0 %v1438
    %2076 = vmatpush1.bf16.msra.mxu0 %v1437
    %2077 = vmatprep.subr.bf16.mxu0 %v1444
    %2078 = vmatpush1.bf16.msra.mxu0 %v1443
    %2079 = vmatprep.subr.bf16.mxu0 %v1450
    %2080 = vmatpush1.bf16.msra.mxu0 %v1449
    %2081 = vmatprep.subr.bf16.mxu0 %v1456
    %2082 = vmatpush1.bf16.msra.mxu0 %v1455
    %2083 = vmatprep.subr.bf16.mxu0 %v1462
    %2084 = vmatpush1.bf16.msra.mxu0 %v1461
    %2085 = vmatprep.subr.bf16.mxu0 %v1468
    %2086 = vmatpush1.bf16.msra.mxu0 %v1467
    %2087 = vmatprep.subr.bf16.mxu0 %v1474
    %2088 = vmatpush1.bf16.msra.mxu0 %v1473
    %2089 = vmatprep.subr.bf16.mxu0 %v1480
    %2090 = vmatpush1.bf16.msra.mxu0 %v1479
    %2091 = vmatprep.subr.bf16.mxu0 %v1486
    %2092 = vmatpush1.bf16.msra.mxu0 %v1485
    %2093 = vmatprep.subr.bf16.mxu0 %v1492
    %2094 = vmatpush1.bf16.msra.mxu0 %v1491
    %2095 = vmatprep.subr.bf16.mxu0 %v1498
    %2096 = vmatpush1.bf16.msra.mxu0 %v1497
    %2097 = vmatprep.subr.bf16.mxu0 %v1504
    %2098 = vmatpush1.bf16.msra.mxu0 %v1503
    %2099 = vmatprep.subr.bf16.mxu0 %v1510
    %2100 = vmatpush1.bf16.msra.mxu0 %v1509
    %2101 = vmatprep.mubr.bf16.mxu0 %v134
    %2102 = vmatmul.mubr.bf16.gmra.mrb[0].mxu0 %v133
    %v2103 = vpop.f32.mrb[0].mxu0
    %v2104 = vadd.f32 %v2061, %v2103
    %v2105 = vpop.f32.mrb[0].mxu0
    %v2106 = vadd.f32 %v2063, %v2105
    %v2107 = vpop.f32.mrb[0].mxu0
    %v2108 = vadd.f32 %v2065, %v2107
    %v2109 = vpop.f32.mrb[0].mxu0
    %v2110 = vadd.f32 %v2067, %v2109
    %2111 = vdwg.mxu0
    %2112 = vmatprep.subr.bf16.mxu0 %v1516
    %2113 = vmatpush1.bf16.msra.mxu0 %v1515
    %2114 = vmatprep.subr.bf16.mxu0 %v1522
    %2115 = vmatpush1.bf16.msra.mxu0 %v1521
    %2116 = vmatprep.subr.bf16.mxu0 %v1528
    %2117 = vmatpush1.bf16.msra.mxu0 %v1527
    %2118 = vmatprep.subr.bf16.mxu0 %v1534
    %2119 = vmatpush1.bf16.msra.mxu0 %v1533
    %2120 = vmatprep.subr.bf16.mxu0 %v1540
    %2121 = vmatpush1.bf16.msra.mxu0 %v1539
    %2122 = vmatprep.subr.bf16.mxu0 %v1546
    %2123 = vmatpush1.bf16.msra.mxu0 %v1545
    %2124 = vmatprep.subr.bf16.mxu0 %v1552
    %2125 = vmatpush1.bf16.msra.mxu0 %v1551
    %2126 = vmatprep.subr.bf16.mxu0 %v1558
    %2127 = vmatpush1.bf16.msra.mxu0 %v1557
    %2128 = vmatprep.subr.bf16.mxu0 %v1564
    %2129 = vmatpush1.bf16.msra.mxu0 %v1563
    %2130 = vmatprep.subr.bf16.mxu0 %v1570
    %2131 = vmatpush1.bf16.msra.mxu0 %v1569
    %2132 = vmatprep.subr.bf16.mxu0 %v1576
    %2133 = vmatpush1.bf16.msra.mxu0 %v1575
    %2134 = vmatprep.subr.bf16.mxu0 %v1582
    %2135 = vmatpush1.bf16.msra.mxu0 %v1581
    %2136 = vmatprep.subr.bf16.mxu0 %v1588
    %2137 = vmatpush1.bf16.msra.mxu0 %v1587
    %2138 = vmatprep.subr.bf16.mxu0 %v1594
    %2139 = vmatpush1.bf16.msra.mxu0 %v1593
    %2140 = vmatprep.subr.bf16.mxu0 %v1600
    %2141 = vmatpush1.bf16.msra.mxu0 %v1599
    %2142 = vmatprep.subr.bf16.mxu0 %v1606
    %2143 = vmatpush1.bf16.msra.mxu0 %v1605
    %2144 = vmatprep.mubr.bf16.mxu0 %v136
    %2145 = vmatmul.mubr.bf16.gmra.mrb[0].mxu0 %v135
    %v2146 = vpop.f32.mrb[0].mxu0
    %v2147 = vadd.f32 %v2104, %v2146
    %v2148 = vpop.f32.mrb[0].mxu0
    %v2149 = vadd.f32 %v2106, %v2148
    %v2150 = vpop.f32.mrb[0].mxu0
    %v2151 = vadd.f32 %v2108, %v2150
    %v2152 = vpop.f32.mrb[0].mxu0
    %v2153 = vadd.f32 %v2110, %v2152
    %2154 = vdwg.mxu0
    %2155 = vmatprep.subr.bf16.mxu0 %v1326
    %2156 = vmatpush1.bf16.msra.mxu0 %v1325
    %2157 = vmatprep.subr.bf16.mxu0 %v1332
    %2158 = vmatpush1.bf16.msra.mxu0 %v1331
    %2159 = vmatprep.subr.bf16.mxu0 %v1338
    %2160 = vmatpush1.bf16.msra.mxu0 %v1337
    %2161 = vmatprep.subr.bf16.mxu0 %v1344
    %2162 = vmatpush1.bf16.msra.mxu0 %v1343
    %2163 = vmatprep.subr.bf16.mxu0 %v1350
    %2164 = vmatpush1.bf16.msra.mxu0 %v1349
    %2165 = vmatprep.subr.bf16.mxu0 %v1356
    %2166 = vmatpush1.bf16.msra.mxu0 %v1355
    %2167 = vmatprep.subr.bf16.mxu0 %v1362
    %2168 = vmatpush1.bf16.msra.mxu0 %v1361
    %2169 = vmatprep.subr.bf16.mxu0 %v1368
    %2170 = vmatpush1.bf16.msra.mxu0 %v1367
    %2171 = vmatprep.subr.bf16.mxu0 %v1374
    %2172 = vmatpush1.bf16.msra.mxu0 %v1373
    %2173 = vmatprep.subr.bf16.mxu0 %v1380
    %2174 = vmatpush1.bf16.msra.mxu0 %v1379
    %2175 = vmatprep.subr.bf16.mxu0 %v1386
    %2176 = vmatpush1.bf16.msra.mxu0 %v1385
    %2177 = vmatprep.subr.bf16.mxu0 %v1392
    %2178 = vmatpush1.bf16.msra.mxu0 %v1391
    %2179 = vmatprep.subr.bf16.mxu0 %v1398
    %2180 = vmatpush1.bf16.msra.mxu0 %v1397
    %2181 = vmatprep.subr.bf16.mxu0 %v1404
    %2182 = vmatpush1.bf16.msra.mxu0 %v1403
    %2183 = vmatprep.subr.bf16.mxu0 %v1410
    %2184 = vmatpush1.bf16.msra.mxu0 %v1409
    %2185 = vmatprep.subr.bf16.mxu0 %v1416
    %2186 = vmatpush1.bf16.msra.mxu0 %v1415
    %2187 = vmatprep.mubr.bf16.mxu0 %v132
    %2188 = vmatmul.mubr.bf16.gmra.mrb[0].mxu0 %v131
    %v2189 = vpop.f32.mrb[0].mxu0
    %v2190 = vadd.f32 %v446, %v2189
    %v2191 = vpop.f32.mrb[0].mxu0
    %v2192 = vadd.f32 %v450, %v2191
    %v2193 = vpop.f32.mrb[0].mxu0
    %v2194 = vadd.f32 %v446, %v2193
    %v2195 = vpop.f32.mrb[0].mxu0
    %v2196 = vadd.f32 %v450, %v2195
    %2197 = vdwg.mxu0
    %2198 = vmatprep.subr.bf16.mxu0 %v1422
    %2199 = vmatpush1.bf16.msra.mxu0 %v1421
    %2200 = vmatprep.subr.bf16.mxu0 %v1428
    %2201 = vmatpush1.bf16.msra.mxu0 %v1427
    %2202 = vmatprep.subr.bf16.mxu0 %v1434
    %2203 = vmatpush1.bf16.msra.mxu0 %v1433
    %2204 = vmatprep.subr.bf16.mxu0 %v1440
    %2205 = vmatpush1.bf16.msra.mxu0 %v1439
    %2206 = vmatprep.subr.bf16.mxu0 %v1446
    %2207 = vmatpush1.bf16.msra.mxu0 %v1445
    %2208 = vmatprep.subr.bf16.mxu0 %v1452
    %2209 = vmatpush1.bf16.msra.mxu0 %v1451
    %2210 = vmatprep.subr.bf16.mxu0 %v1458
    %2211 = vmatpush1.bf16.msra.mxu0 %v1457
    %2212 = vmatprep.subr.bf16.mxu0 %v1464
    %2213 = vmatpush1.bf16.msra.mxu0 %v1463
    %2214 = vmatprep.subr.bf16.mxu0 %v1470
    %2215 = vmatpush1.bf16.msra.mxu0 %v1469
    %2216 = vmatprep.subr.bf16.mxu0 %v1476
    %2217 = vmatpush1.bf16.msra.mxu0 %v1475
    %2218 = vmatprep.subr.bf16.mxu0 %v1482
    %2219 = vmatpush1.bf16.msra.mxu0 %v1481
    %2220 = vmatprep.subr.bf16.mxu0 %v1488
    %2221 = vmatpush1.bf16.msra.mxu0 %v1487
    %2222 = vmatprep.subr.bf16.mxu0 %v1494
    %2223 = vmatpush1.bf16.msra.mxu0 %v1493
    %2224 = vmatprep.subr.bf16.mxu0 %v1500
    %2225 = vmatpush1.bf16.msra.mxu0 %v1499
    %2226 = vmatprep.subr.bf16.mxu0 %v1506
    %2227 = vmatpush1.bf16.msra.mxu0 %v1505
    %2228 = vmatprep.subr.bf16.mxu0 %v1512
    %2229 = vmatpush1.bf16.msra.mxu0 %v1511
    %2230 = vmatprep.mubr.bf16.mxu0 %v134
    %2231 = vmatmul.mubr.bf16.gmra.mrb[0].mxu0 %v133
    %v2232 = vpop.f32.mrb[0].mxu0
    %v2233 = vadd.f32 %v2190, %v2232
    %v2234 = vpop.f32.mrb[0].mxu0
    %v2235 = vadd.f32 %v2192, %v2234
    %v2236 = vpop.f32.mrb[0].mxu0
    %v2237 = vadd.f32 %v2194, %v2236
    %v2238 = vpop.f32.mrb[0].mxu0
    %v2239 = vadd.f32 %v2196, %v2238
    %2240 = vdwg.mxu0
    %2241 = vmatprep.subr.bf16.mxu0 %v1518
    %2242 = vmatpush1.bf16.msra.mxu0 %v1517
    %2243 = vmatprep.subr.bf16.mxu0 %v1524
    %2244 = vmatpush1.bf16.msra.mxu0 %v1523
    %2245 = vmatprep.subr.bf16.mxu0 %v1530
    %2246 = vmatpush1.bf16.msra.mxu0 %v1529
    %2247 = vmatprep.subr.bf16.mxu0 %v1536
    %2248 = vmatpush1.bf16.msra.mxu0 %v1535
    %2249 = vmatprep.subr.bf16.mxu0 %v1542
    %2250 = vmatpush1.bf16.msra.mxu0 %v1541
    %2251 = vmatprep.subr.bf16.mxu0 %v1548
    %2252 = vmatpush1.bf16.msra.mxu0 %v1547
    %2253 = vmatprep.subr.bf16.mxu0 %v1554
    %2254 = vmatpush1.bf16.msra.mxu0 %v1553
    %2255 = vmatprep.subr.bf16.mxu0 %v1560
    %2256 = vmatpush1.bf16.msra.mxu0 %v1559
    %2257 = vmatprep.subr.bf16.mxu0 %v1566
    %2258 = vmatpush1.bf16.msra.mxu0 %v1565
    %2259 = vmatprep.subr.bf16.mxu0 %v1572
    %2260 = vmatpush1.bf16.msra.mxu0 %v1571
    %2261 = vmatprep.subr.bf16.mxu0 %v1578
    %2262 = vmatpush1.bf16.msra.mxu0 %v1577
    %2263 = vmatprep.subr.bf16.mxu0 %v1584
    %2264 = vmatpush1.bf16.msra.mxu0 %v1583
    %2265 = vmatprep.subr.bf16.mxu0 %v1590
    %2266 = vmatpush1.bf16.msra.mxu0 %v1589
    %2267 = vmatprep.subr.bf16.mxu0 %v1596
    %2268 = vmatpush1.bf16.msra.mxu0 %v1595
    %2269 = vmatprep.subr.bf16.mxu0 %v1602
    %2270 = vmatpush1.bf16.msra.mxu0 %v1601
    %2271 = vmatprep.subr.bf16.mxu0 %v1608
    %2272 = vmatpush1.bf16.msra.mxu0 %v1607
    %2273 = vmatprep.mubr.bf16.mxu0 %v136
    %2274 = vmatmul.mubr.bf16.gmra.mrb[0].mxu0 %v135
    %v2275 = vpop.f32.mrb[0].mxu0
    %v2276 = vadd.f32 %v2233, %v2275
    %v2277 = vpop.f32.mrb[0].mxu0
    %v2278 = vadd.f32 %v2235, %v2277
    %v2279 = vpop.f32.mrb[0].mxu0
    %v2280 = vadd.f32 %v2237, %v2279
    %v2281 = vpop.f32.mrb[0].mxu0
    %v2282 = vadd.f32 %v2239, %v2281
    %2283 = vdwg.mxu0
    %v2284 = vtanh.pop %v2018
    %v2285 = vtanh.pop %v2020
    %v2286 = vtanh.pop %v2147
    %v2287 = vtanh.pop %v2149
    %v2288 = vtanh.pop %v2276
    %v2289 = vtanh.pop %v2278
    %v2290 = vtanh.pop %v2022
    %v2291 = vtanh.pop %v2024
    %v2292 = vtanh.pop %v2151
    %v2293 = vtanh.pop %v2153
    %v2294 = vtanh.pop %v2280
    %v2295 = vtanh.pop %v2282
    %v2296 = vpack.c.bf16 %v2290, %v2284
    %v2297 = vpack.c.bf16 %v2291, %v2285
    %v2298 = vpack.c.bf16 %v2292, %v2286
    %v2299 = vpack.c.bf16 %v2293, %v2287
    %v2300 = vpack.c.bf16 %v2294, %v2288
    %v2301 = vpack.c.bf16 %v2295, %v2289
    %v2302 = vld [vmem:[%s3] sm:$0xf]
    %v2303 = vld [vmem:[%s3 + $0x4] sm:$0xf]
    %v2304 = vld [vmem:[%s3 + $0x8] sm:$0xf]
    %v2305 = vld [vmem:[%s3 + $0xc] sm:$0xf]
    %v2306 = vld [vmem:[%s3 + $0x10] sm:$0xf]
    %v2307 = vld [vmem:[%s3 + $0x14] sm:$0xf]
    %v2308 = vld [vmem:[%s3 + $0x18] sm:$0xf]
    %v2309 = vld [vmem:[%s3 + $0x1c] sm:$0xf]
    %v2310 = vld [vmem:[%s3 + $0x20] sm:$0xf]
    %v2311 = vld [vmem:[%s3 + $0x24] sm:$0xf]
    %v2312 = vld [vmem:[%s3 + $0x28] sm:$0xf]
    %v2313 = vld [vmem:[%s3 + $0x2c] sm:$0xf]
    %v2314 = vld [vmem:[%s3 + $0x30] sm:$0xf]
    %v2315 = vld [vmem:[%s3 + $0x34] sm:$0xf]
    %v2316 = vld [vmem:[%s3 + $0x38] sm:$0xf]
    %v2317 = vld [vmem:[%s3 + $0x3c] sm:$0xf]
    %v2318 = vld [vmem:[%s3 + $0x40] sm:$0xf]
    %v2319 = vld [vmem:[%s3 + $0x44] sm:$0xf]
    %v2320 = vld [vmem:[%s3 + $0x48] sm:$0xf]
    %v2321 = vld [vmem:[%s3 + $0x4c] sm:$0xf]
    %v2322 = vld [vmem:[%s3 + $0x50] sm:$0xf]
    %v2323 = vld [vmem:[%s3 + $0x54] sm:$0xf]
    %v2324 = vld [vmem:[%s3 + $0x58] sm:$0xf]
    %v2325 = vld [vmem:[%s3 + $0x5c] sm:$0xf]
    %v2326 = vld [vmem:[%s3 + $0x60] sm:$0xf]
    %v2327 = vld [vmem:[%s3 + $0x64] sm:$0xf]
    %v2328 = vld [vmem:[%s3 + $0x68] sm:$0xf]
    %v2329 = vld [vmem:[%s3 + $0x6c] sm:$0xf]
    %v2330 = vld [vmem:[%s3 + $0x70] sm:$0xf]
    %v2331 = vld [vmem:[%s3 + $0x74] sm:$0xf]
    %v2332 = vld [vmem:[%s3 + $0x78] sm:$0xf]
    %v2333 = vld [vmem:[%s3 + $0x7c] sm:$0xf]
    %v2334 = vld [vmem:[%s3 + $0x80] sm:$0xf]
    %v2335 = vld [vmem:[%s3 + $0x84] sm:$0xf]
    %v2336 = vld [vmem:[%s3 + $0x88] sm:$0xf]
    %v2337 = vld [vmem:[%s3 + $0x8c] sm:$0xf]
    %v2338 = vld [vmem:[%s3 + $0x90] sm:$0xf]
    %v2339 = vld [vmem:[%s3 + $0x94] sm:$0xf]
    %v2340 = vld [vmem:[%s3 + $0x98] sm:$0xf]
    %v2341 = vld [vmem:[%s3 + $0x9c] sm:$0xf]
    %v2342 = vld [vmem:[%s3 + $0xa0] sm:$0xf]
    %v2343 = vld [vmem:[%s3 + $0xa4] sm:$0xf]
    %v2344 = vld [vmem:[%s3 + $0xa8] sm:$0xf]
    %v2345 = vld [vmem:[%s3 + $0xac] sm:$0xf]
    %v2346 = vld [vmem:[%s3 + $0xb0] sm:$0xf]
    %v2347 = vld [vmem:[%s3 + $0xb4] sm:$0xf]
    %v2348 = vld [vmem:[%s3 + $0xb8] sm:$0xf]
    %v2349 = vld [vmem:[%s3 + $0xbc] sm:$0xf]
    %v2350 = vld [vmem:[%s3 + $0xc0] sm:$0xf]
    %v2351 = vld [vmem:[%s3 + $0xc4] sm:$0xf]
    %v2352 = vld [vmem:[%s3 + $0xc8] sm:$0xf]
    %v2353 = vld [vmem:[%s3 + $0xcc] sm:$0xf]
    %v2354 = vld [vmem:[%s3 + $0xd0] sm:$0xf]
    %v2355 = vld [vmem:[%s3 + $0xd4] sm:$0xf]
    %v2356 = vld [vmem:[%s3 + $0xd8] sm:$0xf]
    %v2357 = vld [vmem:[%s3 + $0xdc] sm:$0xf]
    %v2358 = vld [vmem:[%s3 + $0xe0] sm:$0xf]
    %v2359 = vld [vmem:[%s3 + $0xe4] sm:$0xf]
    %v2360 = vld [vmem:[%s3 + $0xe8] sm:$0xf]
    %v2361 = vld [vmem:[%s3 + $0xec] sm:$0xf]
    %v2362 = vld [vmem:[%s3 + $0xf0] sm:$0xf]
    %v2363 = vld [vmem:[%s3 + $0xf4] sm:$0xf]
    %v2364 = vld [vmem:[%s3 + $0xf8] sm:$0xf]
    %v2365 = vld [vmem:[%s3 + $0xfc] sm:$0xf]
    %v2366 = vld [vmem:[%s3 + $0x100] sm:$0xf]
    %v2367 = vld [vmem:[%s3 + $0x104] sm:$0xf]
    %v2368 = vld [vmem:[%s3 + $0x108] sm:$0xf]
    %v2369 = vld [vmem:[%s3 + $0x10c] sm:$0xf]
    %v2370 = vld [vmem:[%s3 + $0x110] sm:$0xf]
    %v2371 = vld [vmem:[%s3 + $0x114] sm:$0xf]
    %v2372 = vld [vmem:[%s3 + $0x118] sm:$0xf]
    %v2373 = vld [vmem:[%s3 + $0x11c] sm:$0xf]
    %v2374 = vld [vmem:[%s3 + $0x120] sm:$0xf]
    %v2375 = vld [vmem:[%s3 + $0x124] sm:$0xf]
    %v2376 = vld [vmem:[%s3 + $0x128] sm:$0xf]
    %v2377 = vld [vmem:[%s3 + $0x12c] sm:$0xf]
    %v2378 = vld [vmem:[%s3 + $0x130] sm:$0xf]
    %v2379 = vld [vmem:[%s3 + $0x134] sm:$0xf]
    %v2380 = vld [vmem:[%s3 + $0x138] sm:$0xf]
    %v2381 = vld [vmem:[%s3 + $0x13c] sm:$0xf]
    %v2382 = vld [vmem:[%s3 + $0x140] sm:$0xf]
    %v2383 = vld [vmem:[%s3 + $0x144] sm:$0xf]
    %v2384 = vld [vmem:[%s3 + $0x148] sm:$0xf]
    %v2385 = vld [vmem:[%s3 + $0x14c] sm:$0xf]
    %v2386 = vld [vmem:[%s3 + $0x150] sm:$0xf]
    %v2387 = vld [vmem:[%s3 + $0x154] sm:$0xf]
    %v2388 = vld [vmem:[%s3 + $0x158] sm:$0xf]
    %v2389 = vld [vmem:[%s3 + $0x15c] sm:$0xf]
    %v2390 = vld [vmem:[%s3 + $0x160] sm:$0xf]
    %v2391 = vld [vmem:[%s3 + $0x164] sm:$0xf]
    %v2392 = vld [vmem:[%s3 + $0x168] sm:$0xf]
    %v2393 = vld [vmem:[%s3 + $0x16c] sm:$0xf]
    %v2394 = vld [vmem:[%s3 + $0x170] sm:$0xf]
    %v2395 = vld [vmem:[%s3 + $0x174] sm:$0xf]
    %v2396 = vld [vmem:[%s3 + $0x178] sm:$0xf]
    %v2397 = vld [vmem:[%s3 + $0x17c] sm:$0xf]
    %v2398 = vld [vmem:[#allocation8] sm:$0x1]
    %v2400 = vlaneseq
    %v2401 = vshrl.u32 %v2400, 7
    %v2402 = vsub.s32 0, %v2401
    %v2403 = vrot.slane %v2398, %v2402
    %v2501 = vunpack.c.l.b16 %v2302
    %v2502 = vunpack.c.l.b16 %v2303
    %v2503 = vunpack.c.l.b16 %v2304
    %v2504 = vunpack.c.l.b16 %v2305
    %v2505 = vunpack.c.l.b16 %v2306
    %v2506 = vunpack.c.l.b16 %v2307
    %v2507 = vunpack.c.l.b16 %v2308
    %v2508 = vunpack.c.l.b16 %v2309
    %v2509 = vunpack.c.l.b16 %v2310
    %v2510 = vunpack.c.l.b16 %v2311
    %v2511 = vunpack.c.l.b16 %v2312
    %v2512 = vunpack.c.l.b16 %v2313
    %v2513 = vunpack.c.l.b16 %v2314
    %v2514 = vunpack.c.l.b16 %v2315
    %v2515 = vunpack.c.l.b16 %v2316
    %v2516 = vunpack.c.l.b16 %v2317
    %v2517 = vunpack.c.l.b16 %v2318
    %v2518 = vunpack.c.l.b16 %v2319
    %v2519 = vunpack.c.l.b16 %v2320
    %v2520 = vunpack.c.l.b16 %v2321
    %v2521 = vunpack.c.l.b16 %v2322
    %v2522 = vunpack.c.l.b16 %v2323
    %v2523 = vunpack.c.l.b16 %v2324
    %v2524 = vunpack.c.l.b16 %v2325
    %v2525 = vunpack.c.l.b16 %v2326
    %v2526 = vunpack.c.l.b16 %v2327
    %v2527 = vunpack.c.l.b16 %v2328
    %v2528 = vunpack.c.l.b16 %v2329
    %v2529 = vunpack.c.l.b16 %v2330
    %v2530 = vunpack.c.l.b16 %v2331
    %v2531 = vunpack.c.l.b16 %v2332
    %v2532 = vunpack.c.l.b16 %v2333
    %v2533 = vunpack.c.l.b16 %v2334
    %v2534 = vunpack.c.l.b16 %v2335
    %v2535 = vunpack.c.l.b16 %v2336
    %v2536 = vunpack.c.l.b16 %v2337
    %v2537 = vunpack.c.l.b16 %v2338
    %v2538 = vunpack.c.l.b16 %v2339
    %v2539 = vunpack.c.l.b16 %v2340
    %v2540 = vunpack.c.l.b16 %v2341
    %v2541 = vunpack.c.l.b16 %v2342
    %v2542 = vunpack.c.l.b16 %v2343
    %v2543 = vunpack.c.l.b16 %v2344
    %v2544 = vunpack.c.l.b16 %v2345
    %v2545 = vunpack.c.l.b16 %v2346
    %v2546 = vunpack.c.l.b16 %v2347
    %v2547 = vunpack.c.l.b16 %v2348
    %v2548 = vunpack.c.l.b16 %v2349
    %v2549 = vunpack.c.l.b16 %v2350
    %v2550 = vunpack.c.l.b16 %v2351
    %v2551 = vunpack.c.l.b16 %v2352
    %v2552 = vunpack.c.l.b16 %v2353
    %v2553 = vunpack.c.l.b16 %v2354
    %v2554 = vunpack.c.l.b16 %v2355
    %v2555 = vunpack.c.l.b16 %v2356
    %v2556 = vunpack.c.l.b16 %v2357
    %v2557 = vunpack.c.l.b16 %v2358
    %v2558 = vunpack.c.l.b16 %v2359
    %v2559 = vunpack.c.l.b16 %v2360
    %v2560 = vunpack.c.l.b16 %v2361
    %v2561 = vunpack.c.l.b16 %v2362
    %v2562 = vunpack.c.l.b16 %v2363
    %v2563 = vunpack.c.l.b16 %v2364
    %v2564 = vunpack.c.l.b16 %v2365
    %v2565 = vunpack.c.l.b16 %v2366
    %v2566 = vunpack.c.l.b16 %v2367
    %v2567 = vunpack.c.l.b16 %v2368
    %v2568 = vunpack.c.l.b16 %v2369
    %v2569 = vunpack.c.l.b16 %v2370
    %v2570 = vunpack.c.l.b16 %v2371
    %v2571 = vunpack.c.l.b16 %v2372
    %v2572 = vunpack.c.l.b16 %v2373
    %v2573 = vunpack.c.l.b16 %v2374
    %v2574 = vunpack.c.l.b16 %v2375
    %v2575 = vunpack.c.l.b16 %v2376
    %v2576 = vunpack.c.l.b16 %v2377
    %v2577 = vunpack.c.l.b16 %v2378
    %v2578 = vunpack.c.l.b16 %v2379
    %v2579 = vunpack.c.l.b16 %v2380
    %v2580 = vunpack.c.l.b16 %v2381
    %v2581 = vunpack.c.l.b16 %v2382
    %v2582 = vunpack.c.l.b16 %v2383
    %v2583 = vunpack.c.l.b16 %v2384
    %v2584 = vunpack.c.l.b16 %v2385
    %v2585 = vunpack.c.l.b16 %v2386
    %v2586 = vunpack.c.l.b16 %v2387
    %v2587 = vunpack.c.l.b16 %v2388
    %v2588 = vunpack.c.l.b16 %v2389
    %v2589 = vunpack.c.l.b16 %v2390
    %v2590 = vunpack.c.l.b16 %v2391
    %v2591 = vunpack.c.l.b16 %v2392
    %v2592 = vunpack.c.l.b16 %v2393
    %v2593 = vunpack.c.l.b16 %v2394
    %v2594 = vunpack.c.l.b16 %v2395
    %v2595 = vunpack.c.l.b16 %v2396
    %v2596 = vunpack.c.l.b16 %v2397
    %v2597 = vpack.c.b16 %v2502, %v2501
    %v2598 = vpack.c.b16 %v2504, %v2503
    %v2599 = vpack.c.b16 %v2506, %v2505
    %v2600 = vpack.c.b16 %v2508, %v2507
    %v2601 = vpack.c.b16 %v2510, %v2509
    %v2602 = vpack.c.b16 %v2512, %v2511
    %v2603 = vpack.c.b16 %v2514, %v2513
    %v2604 = vpack.c.b16 %v2516, %v2515
    %v2605 = vpack.c.b16 %v2518, %v2517
    %v2606 = vpack.c.b16 %v2520, %v2519
    %v2607 = vpack.c.b16 %v2522, %v2521
    %v2608 = vpack.c.b16 %v2524, %v2523
    %v2609 = vpack.c.b16 %v2526, %v2525
    %v2610 = vpack.c.b16 %v2528, %v2527
    %v2611 = vpack.c.b16 %v2530, %v2529
    %v2612 = vpack.c.b16 %v2532, %v2531
    %v2613 = vpack.c.b16 %v2534, %v2533
    %v2614 = vpack.c.b16 %v2536, %v2535
    %v2615 = vpack.c.b16 %v2538, %v2537
    %v2616 = vpack.c.b16 %v2540, %v2539
    %v2617 = vpack.c.b16 %v2542, %v2541
    %v2618 = vpack.c.b16 %v2544, %v2543
    %v2619 = vpack.c.b16 %v2546, %v2545
    %v2620 = vpack.c.b16 %v2548, %v2547
    %v2621 = vpack.c.b16 %v2550, %v2549
    %v2622 = vpack.c.b16 %v2552, %v2551
    %v2623 = vpack.c.b16 %v2554, %v2553
    %v2624 = vpack.c.b16 %v2556, %v2555
    %v2625 = vpack.c.b16 %v2558, %v2557
    %v2626 = vpack.c.b16 %v2560, %v2559
    %v2627 = vpack.c.b16 %v2562, %v2561
    %v2628 = vpack.c.b16 %v2564, %v2563
    %v2629 = vpack.c.b16 %v2566, %v2565
    %v2630 = vpack.c.b16 %v2568, %v2567
    %v2631 = vpack.c.b16 %v2570, %v2569
    %v2632 = vpack.c.b16 %v2572, %v2571
    %v2633 = vpack.c.b16 %v2574, %v2573
    %v2634 = vpack.c.b16 %v2576, %v2575
    %v2635 = vpack.c.b16 %v2578, %v2577
    %v2636 = vpack.c.b16 %v2580, %v2579
    %v2637 = vpack.c.b16 %v2582, %v2581
    %v2638 = vpack.c.b16 %v2584, %v2583
    %v2639 = vpack.c.b16 %v2586, %v2585
    %v2640 = vpack.c.b16 %v2588, %v2587
    %v2641 = vpack.c.b16 %v2590, %v2589
    %v2642 = vpack.c.b16 %v2592, %v2591
    %v2643 = vpack.c.b16 %v2594, %v2593
    %v2644 = vpack.c.b16 %v2596, %v2595
    %2693 = vmatprep.subr.bf16.mxu0 0
    %2694 = vmatpush1.bf16.msra.mxu0 %v2597
    %2695 = vmatprep.subr.bf16.mxu0 0
    %2696 = vmatpush1.bf16.msra.mxu0 %v2598
    %2697 = vmatprep.subr.bf16.mxu0 0
    %2698 = vmatpush1.bf16.msra.mxu0 %v2599
    %2699 = vmatprep.subr.bf16.mxu0 0
    %2700 = vmatpush1.bf16.msra.mxu0 %v2600
    %2701 = vmatprep.subr.bf16.mxu0 0
    %2702 = vmatpush1.bf16.msra.mxu0 %v2601
    %2703 = vmatprep.subr.bf16.mxu0 0
    %2704 = vmatpush1.bf16.msra.mxu0 %v2602
    %2705 = vmatprep.subr.bf16.mxu0 0
    %2706 = vmatpush1.bf16.msra.mxu0 %v2603
    %2707 = vmatprep.subr.bf16.mxu0 0
    %2708 = vmatpush1.bf16.msra.mxu0 %v2604
    %2709 = vmatprep.subr.bf16.mxu0 0
    %2710 = vmatpush1.bf16.msra.mxu0 %v2605
    %2711 = vmatprep.subr.bf16.mxu0 0
    %2712 = vmatpush1.bf16.msra.mxu0 %v2606
    %2713 = vmatprep.subr.bf16.mxu0 0
    %2714 = vmatpush1.bf16.msra.mxu0 %v2607
    %2715 = vmatprep.subr.bf16.mxu0 0
    %2716 = vmatpush1.bf16.msra.mxu0 %v2608
    %2717 = vmatprep.subr.bf16.mxu0 0
    %2718 = vmatpush1.bf16.msra.mxu0 %v2609
    %2719 = vmatprep.subr.bf16.mxu0 0
    %2720 = vmatpush1.bf16.msra.mxu0 %v2610
    %2721 = vmatprep.subr.bf16.mxu0 0
    %2722 = vmatpush1.bf16.msra.mxu0 %v2611
    %2723 = vmatprep.subr.bf16.mxu0 0
    %2724 = vmatpush1.bf16.msra.mxu0 %v2612
    %2725 = vmatprep.mubr.bf16.mxu0 %v2297
    %2726 = vmatmul.mubr.bf16.gmra.mrb[0].mxu0 %v2296
    %v2727 = vpop.f32.mrb[0].mxu0
    %v2728 = vadd.f32 %v2403, %v2727
    %v2729 = vpop.f32.mrb[0].mxu0
    %v2730 = vpop.f32.mrb[0].mxu0
    %v2731 = vadd.f32 %v2403, %v2730
    %v2732 = vpop.f32.mrb[0].mxu0
    %2733 = vdwg.mxu0
    %2734 = vmatprep.subr.bf16.mxu0 0
    %2735 = vmatpush1.bf16.msra.mxu0 %v2613
    %2736 = vmatprep.subr.bf16.mxu0 0
    %2737 = vmatpush1.bf16.msra.mxu0 %v2614
    %2738 = vmatprep.subr.bf16.mxu0 0
    %2739 = vmatpush1.bf16.msra.mxu0 %v2615
    %2740 = vmatprep.subr.bf16.mxu0 0
    %2741 = vmatpush1.bf16.msra.mxu0 %v2616
    %2742 = vmatprep.subr.bf16.mxu0 0
    %2743 = vmatpush1.bf16.msra.mxu0 %v2617
    %2744 = vmatprep.subr.bf16.mxu0 0
    %2745 = vmatpush1.bf16.msra.mxu0 %v2618
    %2746 = vmatprep.subr.bf16.mxu0 0
    %2747 = vmatpush1.bf16.msra.mxu0 %v2619
    %2748 = vmatprep.subr.bf16.mxu0 0
    %2749 = vmatpush1.bf16.msra.mxu0 %v2620
    %2750 = vmatprep.subr.bf16.mxu0 0
    %2751 = vmatpush1.bf16.msra.mxu0 %v2621
    %2752 = vmatprep.subr.bf16.mxu0 0
    %2753 = vmatpush1.bf16.msra.mxu0 %v2622
    %2754 = vmatprep.subr.bf16.mxu0 0
    %2755 = vmatpush1.bf16.msra.mxu0 %v2623
    %2756 = vmatprep.subr.bf16.mxu0 0
    %2757 = vmatpush1.bf16.msra.mxu0 %v2624
    %2758 = vmatprep.subr.bf16.mxu0 0
    %2759 = vmatpush1.bf16.msra.mxu0 %v2625
    %2760 = vmatprep.subr.bf16.mxu0 0
    %2761 = vmatpush1.bf16.msra.mxu0 %v2626
    %2762 = vmatprep.subr.bf16.mxu0 0
    %2763 = vmatpush1.bf16.msra.mxu0 %v2627
    %2764 = vmatprep.subr.bf16.mxu0 0
    %2765 = vmatpush1.bf16.msra.mxu0 %v2628
    %2766 = vmatprep.mubr.bf16.mxu0 %v2299
    %2767 = vmatmul.mubr.bf16.gmra.mrb[0].mxu0 %v2298
    %v2768 = vpop.f32.mrb[0].mxu0
    %v2769 = vadd.f32 %v2728, %v2768
    %v2770 = vpop.f32.mrb[0].mxu0
    %v2771 = vpop.f32.mrb[0].mxu0
    %v2772 = vadd.f32 %v2731, %v2771
    %v2773 = vpop.f32.mrb[0].mxu0
    %2774 = vdwg.mxu0
    %2775 = vmatprep.subr.bf16.mxu0 0
    %2776 = vmatpush1.bf16.msra.mxu0 %v2629
    %2777 = vmatprep.subr.bf16.mxu0 0
    %2778 = vmatpush1.bf16.msra.mxu0 %v2630
    %2779 = vmatprep.subr.bf16.mxu0 0
    %2780 = vmatpush1.bf16.msra.mxu0 %v2631
    %2781 = vmatprep.subr.bf16.mxu0 0
    %2782 = vmatpush1.bf16.msra.mxu0 %v2632
    %2783 = vmatprep.subr.bf16.mxu0 0
    %2784 = vmatpush1.bf16.msra.mxu0 %v2633
    %2785 = vmatprep.subr.bf16.mxu0 0
    %2786 = vmatpush1.bf16.msra.mxu0 %v2634
    %2787 = vmatprep.subr.bf16.mxu0 0
    %2788 = vmatpush1.bf16.msra.mxu0 %v2635
    %2789 = vmatprep.subr.bf16.mxu0 0
    %2790 = vmatpush1.bf16.msra.mxu0 %v2636
    %2791 = vmatprep.subr.bf16.mxu0 0
    %2792 = vmatpush1.bf16.msra.mxu0 %v2637
    %2793 = vmatprep.subr.bf16.mxu0 0
    %2794 = vmatpush1.bf16.msra.mxu0 %v2638
    %2795 = vmatprep.subr.bf16.mxu0 0
    %2796 = vmatpush1.bf16.msra.mxu0 %v2639
    %2797 = vmatprep.subr.bf16.mxu0 0
    %2798 = vmatpush1.bf16.msra.mxu0 %v2640
    %2799 = vmatprep.subr.bf16.mxu0 0
    %2800 = vmatpush1.bf16.msra.mxu0 %v2641
    %2801 = vmatprep.subr.bf16.mxu0 0
    %2802 = vmatpush1.bf16.msra.mxu0 %v2642
    %2803 = vmatprep.subr.bf16.mxu0 0
    %2804 = vmatpush1.bf16.msra.mxu0 %v2643
    %2805 = vmatprep.subr.bf16.mxu0 0
    %2806 = vmatpush1.bf16.msra.mxu0 %v2644
    %2807 = vmatprep.mubr.bf16.mxu0 %v2301
    %2808 = vmatmul.mubr.bf16.gmra.mrb[0].mxu0 %v2300
    %v2809 = vpop.f32.mrb[0].mxu0
    %v2810 = vadd.f32 %v2769, %v2809
    %v2811 = vpop.f32.mrb[0].mxu0
    %v2812 = vpop.f32.mrb[0].mxu0
    %v2813 = vadd.f32 %v2772, %v2812
    %v2814 = vpop.f32.mrb[0].mxu0
    %2815 = vdwg.mxu0
    %v2816 = vmax.f32 %v2810, 0.0
    %v2817 = vmax.f32 %v2813, 0.0
    %v2818 = vld [vmem:[%s5] sm:$0xff]
    %v2819 = vld [vmem:[%s5 + $0x8] sm:$0xff]
    %v2820 = vld [vmem:[%s5 + $0x10] sm:$0xff]
    %v2821 = vld [vmem:[%s5 + $0x18] sm:$0xff]
    %v2822 = vld [vmem:[%s5 + $0x20] sm:$0xff]
    %v2823 = vld [vmem:[%s5 + $0x28] sm:$0xff]
    %v2824 = vld [vmem:[%s5 + $0x30] sm:$0xff]
    %v2825 = vld [vmem:[%s5 + $0x38] sm:$0xff]
    %v2826 = vld [vmem:[#allocation10] sm:$0x1]
    %v2828 = vlaneseq
    %v2829 = vshrl.u32 %v2828, 7
    %v2830 = vsub.s32 0, %v2829
    %v2831 = vrot.slane %v2826, %v2830
    %vm2833 = vcmask 523264
    %v2835 = vsel %vm2833, %v2816, 0
    %v2838 = vsel %vm2833, %v2817, 0
    %2840 = vmatprep.subr.mxu0 0.0
    %2841 = vmatpush1.msra.mxu0 %v2818
    %2842 = vmatprep.subr.mxu0 0.0
    %2843 = vmatpush1.msra.mxu0 %v2819
    %2844 = vmatprep.subr.mxu0 0.0
    %2845 = vmatpush1.msra.mxu0 %v2820
    %2846 = vmatprep.subr.mxu0 0.0
    %2847 = vmatpush1.msra.mxu0 %v2821
    %2848 = vmatprep.subr.mxu0 0.0
    %2849 = vmatpush1.msra.mxu0 %v2822
    %2850 = vmatprep.subr.mxu0 0.0
    %2851 = vmatpush1.msra.mxu0 %v2823
    %2852 = vmatprep.subr.mxu0 0.0
    %2853 = vmatpush1.msra.mxu0 %v2824
    %2854 = vmatprep.subr.mxu0 0.0
    %2855 = vmatpush1.msra.mxu0 %v2825
    %2856 = vmatprep.subr.mxu0 0.0
    %2857 = vmatpush1.msra.mxu0 0.0
    %2858 = vmatprep.subr.mxu0 0.0
    %2859 = vmatpush1.msra.mxu0 0.0
    %2860 = vmatprep.subr.mxu0 0.0
    %2861 = vmatpush1.msra.mxu0 0.0
    %2862 = vmatprep.subr.mxu0 0.0
    %2863 = vmatpush1.msra.mxu0 0.0
    %2864 = vmatprep.subr.mxu0 0.0
    %2865 = vmatpush1.msra.mxu0 0.0
    %2866 = vmatprep.subr.mxu0 0.0
    %2867 = vmatpush1.msra.mxu0 0.0
    %2868 = vmatprep.subr.mxu0 0.0
    %2869 = vmatpush1.msra.mxu0 0.0
    %2870 = vmatprep.subr.mxu0 0.0
    %2871 = vmatpush1.msra.mxu0 0.0
    %2872 = vmatprep.subr.mxu0 0.0
    %2873 = vmatpush1.msra.mxu0 0.0
    %2874 = vmatprep.subr.mxu0 0.0
    %2875 = vmatpush1.msra.mxu0 0.0
    %2876 = vmatprep.subr.mxu0 0.0
    %2877 = vmatpush1.msra.mxu0 0.0
    %2878 = vmatprep.subr.mxu0 0.0
    %2879 = vmatpush1.msra.mxu0 0.0
    %2880 = vmatprep.subr.mxu0 0.0
    %2881 = vmatpush1.msra.mxu0 0.0
    %2882 = vmatprep.subr.mxu0 0.0
    %2883 = vmatpush1.msra.mxu0 0.0
    %2884 = vmatprep.subr.mxu0 0.0
    %2885 = vmatpush1.msra.mxu0 0.0
    %2886 = vmatprep.subr.mxu0 0.0
    %2887 = vmatpush1.msra.mxu0 0.0
    %2888 = vmatprep.subr.mxu0 0.0
    %2889 = vmatpush1.msra.mxu0 0.0
    %2890 = vmatprep.subr.mxu0 0.0
    %2891 = vmatpush1.msra.mxu0 0.0
    %2892 = vmatprep.subr.mxu0 0.0
    %2893 = vmatpush1.msra.mxu0 0.0
    %2894 = vmatprep.subr.mxu0 0.0
    %2895 = vmatpush1.msra.mxu0 0.0
    %2896 = vmatprep.subr.mxu0 0.0
    %2897 = vmatpush1.msra.mxu0 0.0
    %2898 = vmatprep.subr.mxu0 0.0
    %2899 = vmatpush1.msra.mxu0 0.0
    %2900 = vmatprep.subr.mxu0 0.0
    %2901 = vmatpush1.msra.mxu0 0.0
    %2902 = vmatprep.subr.mxu0 0.0
    %2903 = vmatpush1.msra.mxu0 0.0
    %2904 = vmatprep.mubr.f32.mxu0 0.0
    %2905 = vmatmul.mubr.f32.gmra.mrb[0].mxu0 %v2835
    %v2906 = vpop.f32.mrb[0].mxu0
    %v2907 = vadd.f32 %v2831, %v2906
    %v2908 = vpop.f32.mrb[0].mxu0
    %2909 = vmatprep.mubr.f32.mxu0 0.0
    %2910 = vmatmul.mubr.f32.gmra.mrb[0].mxu0 %v2838
    %v2911 = vpop.f32.mrb[0].mxu0
    %v2912 = vadd.f32 %v2831, %v2911
    %v2913 = vpop.f32.mrb[0].mxu0
    %2914 = vdwg.mxu0
    %v2915 = vmax.f32 %v2907, 0.0
    %v2916 = vmax.f32 %v2912, 0.0
    %v2917 = vld [vmem:[#allocation11] sm:$0xff]
    %v2918 = vld [vmem:[#allocation13] sm:$0x1]
    %v2920 = vlaneseq
    %v2921 = vshrl.u32 %v2920, 7
    %v2922 = vsub.s32 0, %v2921
    %v2923 = vrot.slane %v2918, %v2922
    %vm2925 = vcmask 64512
    %v2927 = vsel %vm2925, %v2915, 0
    %v2930 = vsel %vm2925, %v2916, 0
    %2932 = vmatprep.subr.mxu0 0.0
    %2933 = vmatpush1.msra.mxu0 %v2917
    %2934 = vmatprep.subr.mxu0 0.0
    %2935 = vmatpush1.msra.mxu0 0.0
    %2936 = vmatprep.subr.mxu0 0.0
    %2937 = vmatpush1.msra.mxu0 0.0
    %2938 = vmatprep.subr.mxu0 0.0
    %2939 = vmatpush1.msra.mxu0 0.0
    %2940 = vmatprep.subr.mxu0 0.0
    %2941 = vmatpush1.msra.mxu0 0.0
    %2942 = vmatprep.subr.mxu0 0.0
    %2943 = vmatpush1.msra.mxu0 0.0
    %2944 = vmatprep.subr.mxu0 0.0
    %2945 = vmatpush1.msra.mxu0 0.0
    %2946 = vmatprep.subr.mxu0 0.0
    %2947 = vmatpush1.msra.mxu0 0.0
    %2948 = vmatprep.subr.mxu0 0.0
    %2949 = vmatpush1.msra.mxu0 0.0
    %2950 = vmatprep.subr.mxu0 0.0
    %2951 = vmatpush1.msra.mxu0 0.0
    %2952 = vmatprep.subr.mxu0 0.0
    %2953 = vmatpush1.msra.mxu0 0.0
    %2954 = vmatprep.subr.mxu0 0.0
    %2955 = vmatpush1.msra.mxu0 0.0
    %2956 = vmatprep.subr.mxu0 0.0
    %2957 = vmatpush1.msra.mxu0 0.0
    %2958 = vmatprep.subr.mxu0 0.0
    %2959 = vmatpush1.msra.mxu0 0.0
    %2960 = vmatprep.subr.mxu0 0.0
    %2961 = vmatpush1.msra.mxu0 0.0
    %2962 = vmatprep.subr.mxu0 0.0
    %2963 = vmatpush1.msra.mxu0 0.0
    %2964 = vmatprep.subr.mxu0 0.0
    %2965 = vmatpush1.msra.mxu0 0.0
    %2966 = vmatprep.subr.mxu0 0.0
    %2967 = vmatpush1.msra.mxu0 0.0
    %2968 = vmatprep.subr.mxu0 0.0
    %2969 = vmatpush1.msra.mxu0 0.0
    %2970 = vmatprep.subr.mxu0 0.0
    %2971 = vmatpush1.msra.mxu0 0.0
    %2972 = vmatprep.subr.mxu0 0.0
    %2973 = vmatpush1.msra.mxu0 0.0
    %2974 = vmatprep.subr.mxu0 0.0
    %2975 = vmatpush1.msra.mxu0 0.0
    %2976 = vmatprep.subr.mxu0 0.0
    %2977 = vmatpush1.msra.mxu0 0.0
    %2978 = vmatprep.subr.mxu0 0.0
    %2979 = vmatpush1.msra.mxu0 0.0
    %2980 = vmatprep.subr.mxu0 0.0
    %2981 = vmatpush1.msra.mxu0 0.0
    %2982 = vmatprep.subr.mxu0 0.0
    %2983 = vmatpush1.msra.mxu0 0.0
    %2984 = vmatprep.subr.mxu0 0.0
    %2985 = vmatpush1.msra.mxu0 0.0
    %2986 = vmatprep.subr.mxu0 0.0
    %2987 = vmatpush1.msra.mxu0 0.0
    %2988 = vmatprep.subr.mxu0 0.0
    %2989 = vmatpush1.msra.mxu0 0.0
    %2990 = vmatprep.subr.mxu0 0.0
    %2991 = vmatpush1.msra.mxu0 0.0
    %2992 = vmatprep.subr.mxu0 0.0
    %2993 = vmatpush1.msra.mxu0 0.0
    %2994 = vmatprep.subr.mxu0 0.0
    %2995 = vmatpush1.msra.mxu0 0.0
    %2996 = vmatprep.mubr.f32.mxu0 0.0
    %2997 = vmatmul.mubr.f32.gmra.mrb[0].mxu0 %v2927
    %v2998 = vpop.f32.mrb[0].mxu0
    %v2999 = vadd.f32 %v2923, %v2998
    %v3000 = vpop.f32.mrb[0].mxu0
    %3001 = vmatprep.mubr.f32.mxu0 0.0
    %3002 = vmatmul.mubr.f32.gmra.mrb[0].mxu0 %v2930
    %v3003 = vpop.f32.mrb[0].mxu0
    %v3004 = vadd.f32 %v2923, %v3003
    %v3005 = vpop.f32.mrb[0].mxu0
    %3006 = vdwg.mxu0
    %3007 = vst [vmem:[#allocation14] sm:$0xff] %v2999
    %3008 = vst [vmem:[#allocation14 + $0x8] sm:$0xff] %v3004
    // Predicated region
    $region66: #{tpu_custom_call.1} parent=1 // pred_check
      _
    $region67: #{tpu_custom_call.1} parent=1 // pred_check_branch
      %3010 = sbr.rel (0) target = $region69
    $region68: #{tpu_custom_call.1} parent=1 // pred_region
      %s3012 = ssub.s32 256, 256
      %3013 = vsyncadd [#allocation4], %s3012
      %s3014 = sshll.u32 [#allocation14], 4
      %s3015 = int_to_ptr.vmem [resolvable:$true] %s3014
      %3020 = dma.vmem_to_hbm [thread:$0]  %s3015, 256, %s9, [#allocation4], 128, 128, 8
    $region69: #{tpu_custom_call.1} parent=1 // pred_fallthru
      _
    // Predicated region
    $region70: #{tpu_custom_call.1} parent=1 // pred_check
      _
    $region71: #{tpu_custom_call.1} parent=1 // pred_check_branch
      %3022 = sbr.rel (0) target = $region73
    $region72: #{tpu_custom_call.1} parent=1 // pred_region
      %3023 = dma.done [#allocation4], 256
    $region73: #{tpu_custom_call.1} parent=1 // pred_fallthru
      _
    %3024 = vsyncpa [#allocation3], 1
    %3025 = vsyncpa [#allocation6], 1
    %3026 = vsyncpa [#allocation9], 1
    %3027 = vsyncpa [#allocation12], 1
    %3028 = vsyncpa [#allocation4], 1

</llo_original>
